<compile_context>
chip_gen: v5e
topology: v5e:2x2
jax: 0.10.0
libtpu: 0.0.40
codegen_flags: <defaults>
</compile_context>

<pallas_src>
import functools

import jax
import jax.numpy as jnp
from jax import lax
from jax.experimental import pallas as pl
from jax.experimental.pallas import tpu as pltpu


def _round_up(a, b):
    return (a + b - 1) // b * b


def _fused_gate_mix_kernel(xf_ref, q_ref, k_ref, v_ref, gp_ref,
                           wq_ref, wk_ref, wv_ref,
                           qs_ref, ks_ref, vs_ref,
                           gate_sc, *, num_experts, kp, off_w2, off_b1, off_b2):
    # ---- TransformAttention gate, computed in-VMEM (never leaves the kernel) --
    x = xf_ref[0]                                   # (1, S*D) flattened frames
    w1t = gp_ref[0:kp, :]                           # (E_pad, S*D) = tile(W1/S)
    # mean-over-frames folded into the MXU contraction (lane-axis contraction).
    h = lax.dot_general(x, w1t, (((1,), (1,)), ((), ())),
                        preferred_element_type=jnp.float32)       # (1, E_pad)
    h = jnp.maximum(h + gp_ref[off_b1:off_b1 + 1, 0:kp], 0.0)     # fc1 + ReLU
    w2 = gp_ref[off_w2:off_w2 + kp, 0:kp]                         # (E_pad, E_pad)
    y = jnp.dot(h, w2, preferred_element_type=jnp.float32)
    y = y + gp_ref[off_b2:off_b2 + 1, 0:kp]
    gate_sc[...] = jax.nn.sigmoid(y)                              # (1, E_pad)

    # ---- dynamic_transformer: mix expert weights with the gate, then project --
    def mix_and_project(inp_ref, w_ref, out_ref):
        mixed = gate_sc[0:1, 0:1] * w_ref[0]                      # (D, H)
        for e in range(1, num_experts):                           # static unroll
            mixed = mixed + gate_sc[0:1, e:e + 1] * w_ref[e]
        proj = jnp.dot(inp_ref[0], mixed, preferred_element_type=jnp.float32)
        out_ref[0] = proj.astype(out_ref.dtype)                   # (S, H)

    mix_and_project(q_ref, wq_ref, qs_ref)
    mix_and_project(k_ref, wk_ref, ks_ref)
    mix_and_project(v_ref, wv_ref, vs_ref)


def pack_gate_params(w1, b1, w2, b2, s):
    """Pack TransformAttention fc1/fc2 params into one lane-dense slab.

    w1: (E, D) fc1.weight (out, in); b1: (E,)
    w2: (E, E) fc2.weight (out, in); b2: (E,)
    s:  number of frames averaged over by torch.mean(x, 1). The 1/s of the mean
        is folded into the tiled W1 rows (same math, slightly different f32
        rounding path than mean-then-matmul).

    Slab layout (rows, S*D), all multi-row sections 8-row aligned:
      rows [0, E_pad)        tile(w1 / s, (1, s))      (zero-padded experts)
      rows [E_pad, 2*E_pad)  w2^T (in, out) in lanes [0, E)
      row  2*E_pad           b1 in lanes [0, E)
      row  2*E_pad + 1       b2 in lanes [0, E)
    Call once at parameter-setup time.
    """
    e, d = w1.shape
    kp = _round_up(e, 8)
    lanes = s * d
    off_w2 = kp
    off_b1 = 2 * kp
    off_b2 = off_b1 + 1
    rows = _round_up(off_b2 + 1, 8)

    slab = jnp.zeros((rows, lanes), jnp.float32)
    slab = slab.at[0:e, :].set(jnp.tile(w1.astype(jnp.float32) / s, (1, s)))
    slab = slab.at[off_w2:off_w2 + e, 0:e].set(w2.astype(jnp.float32).T)
    slab = slab.at[off_b1, 0:e].set(b1.astype(jnp.float32))
    slab = slab.at[off_b2, 0:e].set(b2.astype(jnp.float32))
    meta = dict(num_experts=e, kp=kp, off_w2=off_w2, off_b1=off_b1, off_b2=off_b2)
    return slab, meta


def fused_transform_attention_mix(x_, q, k, v, gate_slab, slab_meta, wq, wk, wv):
    """TransformAttention fused with MultiHeadAttention's dynamic_transformer.

    x_, q, k, v : (B, S, D) float32
    gate_slab   : packed fc1/fc2 params from pack_gate_params
    wq, wk, wv  : (num_experts, D, n_head*d_k) expert weights (the viewed /
                  permuted layout dynamic_transformer builds from weight.t()).
    Returns (qs, ks, vs), each (B, S, n_head*d_k).
    """
    B, S, D = x_.shape
    E, D2, H = wq.shape
    assert D2 == D
    rows, lanes = gate_slab.shape
    assert lanes == S * D

    # Row-major contiguous -> free reshape; gives a lane-dense (1, S*D) gate
    # input per grid step without any in-kernel relayout.
    xf = x_.reshape(B, 1, S * D)

    kernel = functools.partial(_fused_gate_mix_kernel, **slab_meta)
    kp = slab_meta["kp"]

    out_sds = jax.ShapeDtypeStruct((B, S, H), jnp.float32)
    cost = pl.CostEstimate(
        flops=B * (2 * S * D * kp + 2 * kp * kp)      # gate matmuls
              + 3 * B * 2 * E * D * H                 # expert-weight mix
              + 3 * B * 2 * S * D * H,                # q/k/v projections
        transcendentals=B * kp,                       # sigmoid
        bytes_accessed=4 * (4 * B * S * D             # x_, q, k, v
                            + rows * lanes            # padded gate slab
                            + 3 * E * D * H           # expert slabs (DMA'd once)
                            + 3 * B * S * H),         # outputs
    )

    batch_in = pl.BlockSpec((1, S, D), lambda b: (b, 0, 0))
    batch_out = pl.BlockSpec((1, S, H), lambda b: (b, 0, 0))
    full = lambda shape: pl.BlockSpec(shape, lambda b: tuple(0 for _ in shape))

    qs, ks, vs = pl.pallas_call(
        kernel,
        out_shape=(out_sds, out_sds, out_sds),
        grid=(B,),
        in_specs=[
            pl.BlockSpec((1, 1, S * D), lambda b: (b, 0, 0)),     # xf (gate input)
            batch_in, batch_in, batch_in,                         # q, k, v
            full((rows, lanes)),                                  # gate param slab
            full((E, D, H)), full((E, D, H)), full((E, D, H)),    # expert weights
        ],
        out_specs=[batch_out, batch_out, batch_out],
        scratch_shapes=[pltpu.VMEM((1, kp), jnp.float32)],        # resident gate
        compiler_params=pltpu.CompilerParams(
            dimension_semantics=("parallel",)),
        cost_estimate=cost,
    )(xf, q, k, v, gate_slab, wq, wk, wv)
    return qs, ks, vs


def _reference(x_, q, k, v, w1, b1, w2, b2, wq, wk, wv):
    # Mirrors TransformAttention.forward + MultiHeadAttention.dynamic_transformer.
    xm = jnp.mean(x_, axis=1)                                 # torch.mean(x, 1)
    hh = jnp.maximum(xm @ w1.T + b1, 0.0)                     # fc1 + ReLU
    gate = jax.nn.sigmoid(hh @ w2.T + b2)                     # fc2 + Sigmoid

    def dyn(w, inp):
        e, d, hd = w.shape
        mixed = (gate @ w.reshape(e, d * hd)).reshape(-1, d, hd)   # (B, D, H)
        return jnp.einsum("bsd,bdh->bsh", inp, mixed)

    return dyn(wq, q), dyn(wk, k), dyn(wv, v)


if __name__ == "__main__":
    # Model defaults: d_model=64, n_head=3, d_k=d_v=64, num_experts=4; small seq.
    B, S, D = 2, 8, 64
    N_HEAD, DK, NUM_EXPERTS = 3, 64, 4
    H = N_HEAD * DK

    key = jax.random.PRNGKey(0)
    keys = jax.random.split(key, 11)

    x_ = jax.random.normal(keys[0], (B, S, D), dtype=jnp.float32)  # gate input
    q = jax.random.normal(keys[1], (B, S, D), dtype=jnp.float32)
    k = jax.random.normal(keys[2], (B, S, D), dtype=jnp.float32)
    v = jax.random.normal(keys[3], (B, S, D), dtype=jnp.float32)

    # TransformAttention params (PyTorch Linear layout: (out, in)).
    lim1 = 1.0 / (D ** 0.5)
    lim2 = 1.0 / (NUM_EXPERTS ** 0.5)
    w1 = jax.random.uniform(keys[4], (NUM_EXPERTS, D), minval=-lim1, maxval=lim1)
    b1 = jax.random.uniform(keys[5], (NUM_EXPERTS,), minval=-lim1, maxval=lim1)
    w2 = jax.random.uniform(keys[6], (NUM_EXPERTS, NUM_EXPERTS),
                            minval=-lim2, maxval=lim2)
    b2 = jax.random.uniform(keys[7], (NUM_EXPERTS,), minval=-lim2, maxval=lim2)

    # Expert weights in the layout dynamic_transformer builds from
    # {qs,ks,vs}_layer.weight.t(): (num_experts, d_model, n_head*d_k).
    wscale = 1.0 / (D ** 0.5)
    wq = jax.random.normal(keys[8], (NUM_EXPERTS, D, H), dtype=jnp.float32) * wscale
    wk = jax.random.normal(keys[9], (NUM_EXPERTS, D, H), dtype=jnp.float32) * wscale
    wv = jax.random.normal(keys[10], (NUM_EXPERTS, D, H), dtype=jnp.float32) * wscale

    # One-time parameter packing (single lane-dense gate-param DMA at call time).
    gate_slab, slab_meta = pack_gate_params(w1, b1, w2, b2, S)
    gate_slab = jax.block_until_ready(gate_slab)

    qs, ks, vs = fused_transform_attention_mix(
        x_, q, k, v, gate_slab, slab_meta, wq, wk, wv)
    qs, ks, vs = jax.block_until_ready((qs, ks, vs))

    rqs, rks, rvs = _reference(x_, q, k, v, w1, b1, w2, b2, wq, wk, wv)

    assert qs.shape == (B, S, H) and ks.shape == (B, S, H) and vs.shape == (B, S, H)
    for got, want, name in ((qs, rqs, "qs"), (ks, rks, "ks"), (vs, rvs, "vs")):
        assert jnp.allclose(got, want, atol=1e-4, rtol=1e-4), f"{name} mismatch"

    print("KERNEL_OK")
</pallas_src>

<mosaic_0001>
module attributes {stable_mosaic.version = 11 : i64} {
  func.func @_fused_gate_mix_kernel(%arg0: i32, %arg1: memref<1x1x512xf32, #tpu.memory_space<vmem>>, %arg2: memref<1x8x64xf32, #tpu.memory_space<vmem>>, %arg3: memref<1x8x64xf32, #tpu.memory_space<vmem>>, %arg4: memref<1x8x64xf32, #tpu.memory_space<vmem>>, %arg5: memref<24x512xf32, #tpu.memory_space<vmem>>, %arg6: memref<4x64x192xf32, #tpu.memory_space<vmem>>, %arg7: memref<4x64x192xf32, #tpu.memory_space<vmem>>, %arg8: memref<4x64x192xf32, #tpu.memory_space<vmem>>, %arg9: memref<1x8x192xf32, #tpu.memory_space<vmem>>, %arg10: memref<1x8x192xf32, #tpu.memory_space<vmem>>, %arg11: memref<1x8x192xf32, #tpu.memory_space<vmem>>, %arg12: memref<1x8xf32, #tpu.memory_space<vmem>>) attributes {dimension_semantics = [#tpu.dimension_semantics<parallel>], iteration_bounds = array<i64: 2>, scalar_prefetch = 0 : i64, scratch_operands = 1 : i64, tpu.core_type = #tpu.core_type<tc>, window_params = [{transform_indices = @transform_0, window_bounds = array<i64: 1, 1, 512>}, {transform_indices = @transform_1, window_bounds = array<i64: 1, 8, 64>}, {transform_indices = @transform_2, window_bounds = array<i64: 1, 8, 64>}, {transform_indices = @transform_3, window_bounds = array<i64: 1, 8, 64>}, {pipeline_mode = #tpu.pipeline_mode<synchronous>, transform_indices = @transform_4, window_bounds = array<i64: 24, 512>}, {pipeline_mode = #tpu.pipeline_mode<synchronous>, transform_indices = @transform_5, window_bounds = array<i64: 4, 64, 192>}, {pipeline_mode = #tpu.pipeline_mode<synchronous>, transform_indices = @transform_6, window_bounds = array<i64: 4, 64, 192>}, {pipeline_mode = #tpu.pipeline_mode<synchronous>, transform_indices = @transform_7, window_bounds = array<i64: 4, 64, 192>}, {transform_indices = @transform_8, window_bounds = array<i64: 1, 8, 192>}, {transform_indices = @transform_9, window_bounds = array<i64: 1, 8, 192>}, {transform_indices = @transform_10, window_bounds = array<i64: 1, 8, 192>}]} {
    %c0 = arith.constant 0 : index
    %c0_0 = arith.constant 0 : index
    %c0_1 = arith.constant 0 : index
    %0 = vector.load %arg1[%c0, %c0_0, %c0_1] : memref<1x1x512xf32, #tpu.memory_space<vmem>>, vector<1x1x512xf32>
    %1 = vector.shape_cast %0 : vector<1x1x512xf32> to vector<1x512xf32>
    %c0_2 = arith.constant 0 : index
    %c0_3 = arith.constant 0 : index
    %2 = vector.load %arg5[%c0_2, %c0_3] : memref<24x512xf32, #tpu.memory_space<vmem>>, vector<8x512xf32>
    %cst = arith.constant dense<0.000000e+00> : vector<1x8xf32>
    %3 = tpu.matmul %1, %2, %cst {dimension_numbers = #tpu.dot_dimension_numbers<[1], [1], [0], [0], [0, 0, 1, 0], [], []>} : vector<1x512xf32>, vector<8x512xf32>, vector<1x8xf32> -> vector<1x8xf32>
    %c16 = arith.constant 16 : index
    %c0_4 = arith.constant 0 : index
    %4 = vector.load %arg5[%c16, %c0_4] : memref<24x512xf32, #tpu.memory_space<vmem>>, vector<1x8xf32>
    %5 = arith.addf %3, %4 : vector<1x8xf32>
    %cst_5 = arith.constant 0.000000e+00 : f32
    %6 = vector.broadcast %cst_5 : f32 to vector<1x8xf32>
    %7 = arith.maximumf %5, %6 : vector<1x8xf32>
    %c8 = arith.constant 8 : index
    %c0_6 = arith.constant 0 : index
    %8 = vector.load %arg5[%c8, %c0_6] : memref<24x512xf32, #tpu.memory_space<vmem>>, vector<8x8xf32>
    %cst_7 = arith.constant dense<0.000000e+00> : vector<1x8xf32>
    %9 = tpu.matmul %7, %8, %cst_7 {dimension_numbers = #tpu.dot_dimension_numbers<[1], [0], [0], [1], [0, 0, 1, 1], [], []>} : vector<1x8xf32>, vector<8x8xf32>, vector<1x8xf32> -> vector<1x8xf32>
    %c17 = arith.constant 17 : index
    %c0_8 = arith.constant 0 : index
    %10 = vector.load %arg5[%c17, %c0_8] : memref<24x512xf32, #tpu.memory_space<vmem>>, vector<1x8xf32>
    %11 = arith.addf %9, %10 : vector<1x8xf32>
    %12 = arith.negf %11 : vector<1x8xf32>
    %13 = math.exp %12 : vector<1x8xf32>
    %cst_9 = arith.constant 1.000000e+00 : f32
    %14 = vector.broadcast %cst_9 : f32 to vector<1x8xf32>
    %15 = arith.addf %14, %13 : vector<1x8xf32>
    %16 = arith.divf %14, %15 : vector<1x8xf32>
    %c0_10 = arith.constant 0 : index
    %c0_11 = arith.constant 0 : index
    %17 = vector.load %arg12[%c0_10, %c0_11] : memref<1x8xf32, #tpu.memory_space<vmem>>, vector<1x8xf32>
    tpu.vector_store %arg12[%c0_10, %c0_11], %16 {strides = array<i32>} : memref<1x8xf32, #tpu.memory_space<vmem>>, vector<1x8xf32>,
    %c0_12 = arith.constant 0 : index
    %c0_13 = arith.constant 0 : index
    %18 = vector.load %arg12[%c0_12, %c0_13] : memref<1x8xf32, #tpu.memory_space<vmem>>, vector<1x1xf32>
    %c0_14 = arith.constant 0 : index
    %c0_15 = arith.constant 0 : index
    %c0_16 = arith.constant 0 : index
    %19 = vector.load %arg6[%c0_14, %c0_15, %c0_16] : memref<4x64x192xf32, #tpu.memory_space<vmem>>, vector<1x64x192xf32>
    %20 = vector.shape_cast %19 : vector<1x64x192xf32> to vector<64x192xf32>
    %21 = vector.broadcast %18 : vector<1x1xf32> to vector<64x192xf32>
    %22 = arith.mulf %21, %20 : vector<64x192xf32>
    %c0_17 = arith.constant 0 : index
    %c1 = arith.constant 1 : index
    %23 = vector.load %arg12[%c0_17, %c1] : memref<1x8xf32, #tpu.memory_space<vmem>>, vector<1x1xf32>
    %c1_18 = arith.constant 1 : index
    %c0_19 = arith.constant 0 : index
    %c0_20 = arith.constant 0 : index
    %24 = vector.load %arg6[%c1_18, %c0_19, %c0_20] : memref<4x64x192xf32, #tpu.memory_space<vmem>>, vector<1x64x192xf32>
    %25 = vector.shape_cast %24 : vector<1x64x192xf32> to vector<64x192xf32>
    %26 = vector.broadcast %23 : vector<1x1xf32> to vector<64x192xf32>
    %27 = arith.mulf %26, %25 : vector<64x192xf32>
    %28 = arith.addf %22, %27 : vector<64x192xf32>
    %c0_21 = arith.constant 0 : index
    %c2 = arith.constant 2 : index
    %29 = vector.load %arg12[%c0_21, %c2] : memref<1x8xf32, #tpu.memory_space<vmem>>, vector<1x1xf32>
    %c2_22 = arith.constant 2 : index
    %c0_23 = arith.constant 0 : index
    %c0_24 = arith.constant 0 : index
    %30 = vector.load %arg6[%c2_22, %c0_23, %c0_24] : memref<4x64x192xf32, #tpu.memory_space<vmem>>, vector<1x64x192xf32>
    %31 = vector.shape_cast %30 : vector<1x64x192xf32> to vector<64x192xf32>
    %32 = vector.broadcast %29 : vector<1x1xf32> to vector<64x192xf32>
    %33 = arith.mulf %32, %31 : vector<64x192xf32>
    %34 = arith.addf %28, %33 : vector<64x192xf32>
    %c0_25 = arith.constant 0 : index
    %c3 = arith.constant 3 : index
    %35 = vector.load %arg12[%c0_25, %c3] : memref<1x8xf32, #tpu.memory_space<vmem>>, vector<1x1xf32>
    %c3_26 = arith.constant 3 : index
    %c0_27 = arith.constant 0 : index
    %c0_28 = arith.constant 0 : index
    %36 = vector.load %arg6[%c3_26, %c0_27, %c0_28] : memref<4x64x192xf32, #tpu.memory_space<vmem>>, vector<1x64x192xf32>
    %37 = vector.shape_cast %36 : vector<1x64x192xf32> to vector<64x192xf32>
    %38 = vector.broadcast %35 : vector<1x1xf32> to vector<64x192xf32>
    %39 = arith.mulf %38, %37 : vector<64x192xf32>
    %40 = arith.addf %34, %39 : vector<64x192xf32>
    %c0_29 = arith.constant 0 : index
    %c0_30 = arith.constant 0 : index
    %c0_31 = arith.constant 0 : index
    %41 = vector.load %arg2[%c0_29, %c0_30, %c0_31] : memref<1x8x64xf32, #tpu.memory_space<vmem>>, vector<1x8x64xf32>
    %42 = vector.shape_cast %41 : vector<1x8x64xf32> to vector<8x64xf32>
    %cst_32 = arith.constant dense<0.000000e+00> : vector<8x192xf32>
    %43 = tpu.matmul %42, %40, %cst_32 {dimension_numbers = #tpu.dot_dimension_numbers<[1], [0], [0], [1], [0, 0, 1, 1], [], []>} : vector<8x64xf32>, vector<64x192xf32>, vector<8x192xf32> -> vector<8x192xf32>
    %c0_33 = arith.constant 0 : index
    %c0_34 = arith.constant 0 : index
    %c0_35 = arith.constant 0 : index
    %44 = vector.load %arg9[%c0_33, %c0_34, %c0_35] : memref<1x8x192xf32, #tpu.memory_space<vmem>>, vector<1x8x192xf32>
    %45 = vector.shape_cast %44 : vector<1x8x192xf32> to vector<8x192xf32>
    %46 = vector.shape_cast %43 : vector<8x192xf32> to vector<1x8x192xf32>
    tpu.vector_store %arg9[%c0_33, %c0_34, %c0_35], %46 {strides = array<i32>} : memref<1x8x192xf32, #tpu.memory_space<vmem>>, vector<1x8x192xf32>,
    %c0_36 = arith.constant 0 : index
    %c0_37 = arith.constant 0 : index
    %47 = vector.load %arg12[%c0_36, %c0_37] : memref<1x8xf32, #tpu.memory_space<vmem>>, vector<1x1xf32>
    %c0_38 = arith.constant 0 : index
    %c0_39 = arith.constant 0 : index
    %c0_40 = arith.constant 0 : index
    %48 = vector.load %arg7[%c0_38, %c0_39, %c0_40] : memref<4x64x192xf32, #tpu.memory_space<vmem>>, vector<1x64x192xf32>
    %49 = vector.shape_cast %48 : vector<1x64x192xf32> to vector<64x192xf32>
    %50 = vector.broadcast %47 : vector<1x1xf32> to vector<64x192xf32>
    %51 = arith.mulf %50, %49 : vector<64x192xf32>
    %c0_41 = arith.constant 0 : index
    %c1_42 = arith.constant 1 : index
    %52 = vector.load %arg12[%c0_41, %c1_42] : memref<1x8xf32, #tpu.memory_space<vmem>>, vector<1x1xf32>
    %c1_43 = arith.constant 1 : index
    %c0_44 = arith.constant 0 : index
    %c0_45 = arith.constant 0 : index
    %53 = vector.load %arg7[%c1_43, %c0_44, %c0_45] : memref<4x64x192xf32, #tpu.memory_space<vmem>>, vector<1x64x192xf32>
    %54 = vector.shape_cast %53 : vector<1x64x192xf32> to vector<64x192xf32>
    %55 = vector.broadcast %52 : vector<1x1xf32> to vector<64x192xf32>
    %56 = arith.mulf %55, %54 : vector<64x192xf32>
    %57 = arith.addf %51, %56 : vector<64x192xf32>
    %c0_46 = arith.constant 0 : index
    %c2_47 = arith.constant 2 : index
    %58 = vector.load %arg12[%c0_46, %c2_47] : memref<1x8xf32, #tpu.memory_space<vmem>>, vector<1x1xf32>
    %c2_48 = arith.constant 2 : index
    %c0_49 = arith.constant 0 : index
    %c0_50 = arith.constant 0 : index
    %59 = vector.load %arg7[%c2_48, %c0_49, %c0_50] : memref<4x64x192xf32, #tpu.memory_space<vmem>>, vector<1x64x192xf32>
    %60 = vector.shape_cast %59 : vector<1x64x192xf32> to vector<64x192xf32>
    %61 = vector.broadcast %58 : vector<1x1xf32> to vector<64x192xf32>
    %62 = arith.mulf %61, %60 : vector<64x192xf32>
    %63 = arith.addf %57, %62 : vector<64x192xf32>
    %c0_51 = arith.constant 0 : index
    %c3_52 = arith.constant 3 : index
    %64 = vector.load %arg12[%c0_51, %c3_52] : memref<1x8xf32, #tpu.memory_space<vmem>>, vector<1x1xf32>
    %c3_53 = arith.constant 3 : index
    %c0_54 = arith.constant 0 : index
    %c0_55 = arith.constant 0 : index
    %65 = vector.load %arg7[%c3_53, %c0_54, %c0_55] : memref<4x64x192xf32, #tpu.memory_space<vmem>>, vector<1x64x192xf32>
    %66 = vector.shape_cast %65 : vector<1x64x192xf32> to vector<64x192xf32>
    %67 = vector.broadcast %64 : vector<1x1xf32> to vector<64x192xf32>
    %68 = arith.mulf %67, %66 : vector<64x192xf32>
    %69 = arith.addf %63, %68 : vector<64x192xf32>
    %c0_56 = arith.constant 0 : index
    %c0_57 = arith.constant 0 : index
    %c0_58 = arith.constant 0 : index
    %70 = vector.load %arg3[%c0_56, %c0_57, %c0_58] : memref<1x8x64xf32, #tpu.memory_space<vmem>>, vector<1x8x64xf32>
    %71 = vector.shape_cast %70 : vector<1x8x64xf32> to vector<8x64xf32>
    %cst_59 = arith.constant dense<0.000000e+00> : vector<8x192xf32>
    %72 = tpu.matmul %71, %69, %cst_59 {dimension_numbers = #tpu.dot_dimension_numbers<[1], [0], [0], [1], [0, 0, 1, 1], [], []>} : vector<8x64xf32>, vector<64x192xf32>, vector<8x192xf32> -> vector<8x192xf32>
    %c0_60 = arith.constant 0 : index
    %c0_61 = arith.constant 0 : index
    %c0_62 = arith.constant 0 : index
    %73 = vector.load %arg10[%c0_60, %c0_61, %c0_62] : memref<1x8x192xf32, #tpu.memory_space<vmem>>, vector<1x8x192xf32>
    %74 = vector.shape_cast %73 : vector<1x8x192xf32> to vector<8x192xf32>
    %75 = vector.shape_cast %72 : vector<8x192xf32> to vector<1x8x192xf32>
    tpu.vector_store %arg10[%c0_60, %c0_61, %c0_62], %75 {strides = array<i32>} : memref<1x8x192xf32, #tpu.memory_space<vmem>>, vector<1x8x192xf32>,
    %c0_63 = arith.constant 0 : index
    %c0_64 = arith.constant 0 : index
    %76 = vector.load %arg12[%c0_63, %c0_64] : memref<1x8xf32, #tpu.memory_space<vmem>>, vector<1x1xf32>
    %c0_65 = arith.constant 0 : index
    %c0_66 = arith.constant 0 : index
    %c0_67 = arith.constant 0 : index
    %77 = vector.load %arg8[%c0_65, %c0_66, %c0_67] : memref<4x64x192xf32, #tpu.memory_space<vmem>>, vector<1x64x192xf32>
    %78 = vector.shape_cast %77 : vector<1x64x192xf32> to vector<64x192xf32>
    %79 = vector.broadcast %76 : vector<1x1xf32> to vector<64x192xf32>
    %80 = arith.mulf %79, %78 : vector<64x192xf32>
    %c0_68 = arith.constant 0 : index
    %c1_69 = arith.constant 1 : index
    %81 = vector.load %arg12[%c0_68, %c1_69] : memref<1x8xf32, #tpu.memory_space<vmem>>, vector<1x1xf32>
    %c1_70 = arith.constant 1 : index
    %c0_71 = arith.constant 0 : index
    %c0_72 = arith.constant 0 : index
    %82 = vector.load %arg8[%c1_70, %c0_71, %c0_72] : memref<4x64x192xf32, #tpu.memory_space<vmem>>, vector<1x64x192xf32>
    %83 = vector.shape_cast %82 : vector<1x64x192xf32> to vector<64x192xf32>
    %84 = vector.broadcast %81 : vector<1x1xf32> to vector<64x192xf32>
    %85 = arith.mulf %84, %83 : vector<64x192xf32>
    %86 = arith.addf %80, %85 : vector<64x192xf32>
    %c0_73 = arith.constant 0 : index
    %c2_74 = arith.constant 2 : index
    %87 = vector.load %arg12[%c0_73, %c2_74] : memref<1x8xf32, #tpu.memory_space<vmem>>, vector<1x1xf32>
    %c2_75 = arith.constant 2 : index
    %c0_76 = arith.constant 0 : index
    %c0_77 = arith.constant 0 : index
    %88 = vector.load %arg8[%c2_75, %c0_76, %c0_77] : memref<4x64x192xf32, #tpu.memory_space<vmem>>, vector<1x64x192xf32>
    %89 = vector.shape_cast %88 : vector<1x64x192xf32> to vector<64x192xf32>
    %90 = vector.broadcast %87 : vector<1x1xf32> to vector<64x192xf32>
    %91 = arith.mulf %90, %89 : vector<64x192xf32>
    %92 = arith.addf %86, %91 : vector<64x192xf32>
    %c0_78 = arith.constant 0 : index
    %c3_79 = arith.constant 3 : index
    %93 = vector.load %arg12[%c0_78, %c3_79] : memref<1x8xf32, #tpu.memory_space<vmem>>, vector<1x1xf32>
    %c3_80 = arith.constant 3 : index
    %c0_81 = arith.constant 0 : index
    %c0_82 = arith.constant 0 : index
    %94 = vector.load %arg8[%c3_80, %c0_81, %c0_82] : memref<4x64x192xf32, #tpu.memory_space<vmem>>, vector<1x64x192xf32>
    %95 = vector.shape_cast %94 : vector<1x64x192xf32> to vector<64x192xf32>
    %96 = vector.broadcast %93 : vector<1x1xf32> to vector<64x192xf32>
    %97 = arith.mulf %96, %95 : vector<64x192xf32>
    %98 = arith.addf %92, %97 : vector<64x192xf32>
    %c0_83 = arith.constant 0 : index
    %c0_84 = arith.constant 0 : index
    %c0_85 = arith.constant 0 : index
    %99 = vector.load %arg4[%c0_83, %c0_84, %c0_85] : memref<1x8x64xf32, #tpu.memory_space<vmem>>, vector<1x8x64xf32>
    %100 = vector.shape_cast %99 : vector<1x8x64xf32> to vector<8x64xf32>
    %cst_86 = arith.constant dense<0.000000e+00> : vector<8x192xf32>
    %101 = tpu.matmul %100, %98, %cst_86 {dimension_numbers = #tpu.dot_dimension_numbers<[1], [0], [0], [1], [0, 0, 1, 1], [], []>} : vector<8x64xf32>, vector<64x192xf32>, vector<8x192xf32> -> vector<8x192xf32>
    %c0_87 = arith.constant 0 : index
    %c0_88 = arith.constant 0 : index
    %c0_89 = arith.constant 0 : index
    %102 = vector.load %arg11[%c0_87, %c0_88, %c0_89] : memref<1x8x192xf32, #tpu.memory_space<vmem>>, vector<1x8x192xf32>
    %103 = vector.shape_cast %102 : vector<1x8x192xf32> to vector<8x192xf32>
    %104 = vector.shape_cast %101 : vector<8x192xf32> to vector<1x8x192xf32>
    tpu.vector_store %arg11[%c0_87, %c0_88, %c0_89], %104 {strides = array<i32>} : memref<1x8x192xf32, #tpu.memory_space<vmem>>, vector<1x8x192xf32>,
    return
  }
  func.func @transform_0(%arg0: i32) -> (i32, i32, i32) {
    %c0_i32 = arith.constant 0 : i32
    %c0_i32_0 = arith.constant 0 : i32
    %c0_i32_1 = arith.constant 0 : i32
    return %arg0, %c0_i32, %c0_i32_0 : i32, i32, i32
  }
  func.func @transform_1(%arg0: i32) -> (i32, i32, i32) {
    %c0_i32 = arith.constant 0 : i32
    %c0_i32_0 = arith.constant 0 : i32
    %c0_i32_1 = arith.constant 0 : i32
    return %arg0, %c0_i32, %c0_i32_0 : i32, i32, i32
  }
  func.func @transform_2(%arg0: i32) -> (i32, i32, i32) {
    %c0_i32 = arith.constant 0 : i32
    %c0_i32_0 = arith.constant 0 : i32
    %c0_i32_1 = arith.constant 0 : i32
    return %arg0, %c0_i32, %c0_i32_0 : i32, i32, i32
  }
  func.func @transform_3(%arg0: i32) -> (i32, i32, i32) {
    %c0_i32 = arith.constant 0 : i32
    %c0_i32_0 = arith.constant 0 : i32
    %c0_i32_1 = arith.constant 0 : i32
    return %arg0, %c0_i32, %c0_i32_0 : i32, i32, i32
  }
  func.func @transform_4(%arg0: i32) -> (i32, i32) {
    %c0_i32 = arith.constant 0 : i32
    %c0_i32_0 = arith.constant 0 : i32
    %c0_i32_1 = arith.constant 0 : i32
    return %c0_i32, %c0_i32_0 : i32, i32
  }
  func.func @transform_5(%arg0: i32) -> (i32, i32, i32) {
    %c0_i32 = arith.constant 0 : i32
    %c0_i32_0 = arith.constant 0 : i32
    %c0_i32_1 = arith.constant 0 : i32
    %c0_i32_2 = arith.constant 0 : i32
    return %c0_i32, %c0_i32_0, %c0_i32_1 : i32, i32, i32
  }
  func.func @transform_6(%arg0: i32) -> (i32, i32, i32) {
    %c0_i32 = arith.constant 0 : i32
    %c0_i32_0 = arith.constant 0 : i32
    %c0_i32_1 = arith.constant 0 : i32
    %c0_i32_2 = arith.constant 0 : i32
    return %c0_i32, %c0_i32_0, %c0_i32_1 : i32, i32, i32
  }
  func.func @transform_7(%arg0: i32) -> (i32, i32, i32) {
    %c0_i32 = arith.constant 0 : i32
    %c0_i32_0 = arith.constant 0 : i32
    %c0_i32_1 = arith.constant 0 : i32
    %c0_i32_2 = arith.constant 0 : i32
    return %c0_i32, %c0_i32_0, %c0_i32_1 : i32, i32, i32
  }
  func.func @transform_8(%arg0: i32) -> (i32, i32, i32) {
    %c0_i32 = arith.constant 0 : i32
    %c0_i32_0 = arith.constant 0 : i32
    %c0_i32_1 = arith.constant 0 : i32
    return %arg0, %c0_i32, %c0_i32_0 : i32, i32, i32
  }
  func.func @transform_9(%arg0: i32) -> (i32, i32, i32) {
    %c0_i32 = arith.constant 0 : i32
    %c0_i32_0 = arith.constant 0 : i32
    %c0_i32_1 = arith.constant 0 : i32
    return %arg0, %c0_i32, %c0_i32_0 : i32, i32, i32
  }
  func.func @transform_10(%arg0: i32) -> (i32, i32, i32) {
    %c0_i32 = arith.constant 0 : i32
    %c0_i32_0 = arith.constant 0 : i32
    %c0_i32_1 = arith.constant 0 : i32
    return %arg0, %c0_i32, %c0_i32_0 : i32, i32, i32
  }
}

</mosaic_0001>

<llo_original>
// kernel: tpu_custom_call.1
$region0: #{tpu_custom_call.1}
  #allocation0 [shape = 'u32[]', space=smem, size = 0x4, offset = 0x4, fixed_abs, tag = 'smem constant byte address 0x4 - core index']
  #allocation1 [shape = 'u32[72,128]{1,0:T(1,128)}', space=vmem, size = 0x9000, scoped, tag = 'internal scratch']
  #allocation2 [shape = 'f32[1,8]{1,0:T(1,128)}', space=vmem, size = 0x200, scoped, tag = 'scratch operand']
  %s0 = inlined_call_operand.hbm [shape: f32[2,1,512], index: 0, kind: input, shape index: {}]
  %s1 = inlined_call_operand.hbm [shape: f32[2,8,64], index: 1, kind: input, shape index: {}]
  %s2 = inlined_call_operand.hbm [shape: f32[2,8,64], index: 2, kind: input, shape index: {}]
  %s3 = inlined_call_operand.hbm [shape: f32[2,8,64], index: 3, kind: input, shape index: {}]
  %s4 = inlined_call_operand.hbm [shape: f32[24,512], index: 4, kind: input, shape index: {}]
  %s5 = inlined_call_operand.hbm [shape: f32[4,64,192], index: 5, kind: input, shape index: {}]
  %s6 = inlined_call_operand.hbm [shape: f32[4,64,192], index: 6, kind: input, shape index: {}]
  %s7 = inlined_call_operand.hbm [shape: f32[4,64,192], index: 7, kind: input, shape index: {}]
  %s8 = inlined_call_operand.hbm [shape: f32[2,8,192], index: 8, kind: output, shape index: {0}]
  %s9 = inlined_call_operand.hbm [shape: f32[2,8,192], index: 9, kind: output, shape index: {1}]
  %s10 = inlined_call_operand.hbm [shape: f32[2,8,192], index: 10, kind: output, shape index: {2}]
  %11 = xla_tuple %s8, %s9, %s10
  %s12 = sld [smem:[#allocation0]]
  $region113: #{tpu_custom_call.1} parent=0
    _
  %s14 = ssub.s32 1, %s12
  %s15 = scalar_select 0, %s14, %s12
  $region1: #{tpu_custom_call.1} parent=0
    #allocation3 [shape = 'u8[4096]{0}', space=vmem, size = 0x1000, scoped, tag = 'input window, operand 0']
    #allocation4 [shape = 's32[2]{0}', space=sflag, size = 0x8, scoped, tag = 'scoped memory for tpu_custom_call.1']
    #allocation5 [shape = 's32[2]{0}', space=sflag, size = 0x8, scoped, tag = 'scoped memory for tpu_custom_call.1']
    #allocation6 [shape = 'u8[8192]{0}', space=vmem, size = 0x2000, scoped, tag = 'input window, operand 1']
    #allocation7 [shape = 's32[2]{0}', space=sflag, size = 0x8, scoped, tag = 'scoped memory for tpu_custom_call.1']
    #allocation8 [shape = 'u8[8192]{0}', space=vmem, size = 0x2000, scoped, tag = 'input window, operand 2']
    #allocation9 [shape = 'u8[8192]{0}', space=vmem, size = 0x2000, scoped, tag = 'input window, operand 3']
    #allocation10 [shape = 's32[2]{0}', space=sflag, size = 0x8, scoped, tag = 'scoped memory for tpu_custom_call.1']
    #allocation11 [shape = 'u8[49152]{0}', space=vmem, size = 0xc000, scoped, tag = 'input window, operand 4, single buffered']
    #allocation12 [shape = 'u8[262144]{0}', space=vmem, size = 0x40000, scoped, tag = 'input window, operand 5, single buffered']
    #allocation13 [shape = 's32[1]{0}', space=sflag, size = 0x4, scoped, tag = 'scoped memory for tpu_custom_call.1']
    #allocation14 [shape = 'u8[262144]{0}', space=vmem, size = 0x40000, scoped, tag = 'input window, operand 6, single buffered']
    #allocation15 [shape = 'u8[262144]{0}', space=vmem, size = 0x40000, scoped, tag = 'input window, operand 7, single buffered']
    #allocation16 [shape = 's32[1]{0}', space=sflag, size = 0x4, scoped, tag = 'scoped memory for tpu_custom_call.1']
    #allocation17 [shape = 'u8[16384]{0}', space=vmem, size = 0x4000, scoped, tag = 'output window, operand 0']
    #allocation18 [shape = 'u8[16384]{0}', space=vmem, size = 0x4000, scoped, tag = 'output window, operand 1']
    #allocation19 [shape = 's32[2]{0}', space=sflag, size = 0x8, scoped, tag = 'scoped memory for tpu_custom_call.1']
    #allocation20 [shape = 'u8[16384]{0}', space=vmem, size = 0x4000, scoped, tag = 'output window, operand 2']
    %16 = vsyncpa [#allocation4], 0
    %s17 = scalar_lea.sflag [#allocation4], 1
    %18 = vsyncpa %s17, 0
    %19 = vsyncpa [#allocation7], 0
    %s20 = scalar_lea.sflag [#allocation7], 1
    %21 = vsyncpa %s20, 0
    %22 = vsyncpa [#allocation10], 0
    %s23 = scalar_lea.sflag [#allocation10], 1
    %24 = vsyncpa %s23, 0
    %25 = vsyncpa [#allocation13], 0
    %26 = vsyncpa [#allocation16], 0
    %27 = vsyncpa [#allocation5], 0
    %s28 = scalar_lea.sflag [#allocation5], 1
    %29 = vsyncpa %s28, 0
    %30 = vsyncpa [#allocation19], 0
    %s31 = scalar_lea.sflag [#allocation19], 1
    %32 = vsyncpa %s31, 0
    loop: start=0, step=1, limit=4
    $region2: #{tpu_custom_call.1} parent=1 // loop_pre_header
      _
    $region3: #{tpu_custom_call.1} parent=1 // loop_header
      %s34 = sphi 0, %s38
      %p35 = scmp.ge.s32.totalorder %s34, 4
      %s44 = sphi 0, %s46
      %s47 = sphi 0, %s44
      %s48 = sphi 0, %s47
      %s64 = sphi 0, %s48
      %s70 = sphi 0, %s72
      %s73 = sphi 0, %s70
      %s74 = sphi 0, %s73
      %s90 = sphi 0, %s74
      %s96 = sphi 0, %s98
      %s99 = sphi 0, %s96
      %s100 = sphi 0, %s99
      %s116 = sphi 0, %s100
      %s122 = sphi 0, %s124
      %s125 = sphi 0, %s122
      %s126 = sphi 0, %s125
      %s142 = sphi 0, %s126
      %s146 = sphi 0, %s146
      %s148 = sphi 0, %s146
      %s149 = sphi 0, %s148
      %s163 = sphi 0, %s149
      %s167 = sphi 0, %s167
      %s169 = sphi 0, %s167
      %s170 = sphi 0, %s169
      %s184 = sphi 0, %s170
      %s188 = sphi 0, %s188
      %s190 = sphi 0, %s188
      %s191 = sphi 0, %s190
      %s205 = sphi 0, %s191
      %s209 = sphi 0, %s209
      %s211 = sphi 0, %s209
      %s212 = sphi 0, %s211
      %s226 = sphi 0, %s212
      %s232 = sphi 0, %s234
      %s235 = sphi 0, %s232
      %s236 = sphi 0, %s235
      %s252 = sphi 0, %s236
      %s258 = sphi 0, %s260
      %s261 = sphi 0, %s258
      %s262 = sphi 0, %s261
      %s278 = sphi 0, %s262
      %s284 = sphi 0, %s286
      %s287 = sphi 0, %s284
      %s288 = sphi 0, %s287
      %s304 = sphi 0, %s288
    $region4: #{tpu_custom_call.1} parent=1 // loop_header_branch
      %37 = sbr.rel (%p35) target = $region8
    $region5: #{tpu_custom_call.1} parent=1 // loop_body
      %s39 = ssub.s32 %s34, 1
      %s40 = ssub.s32 %s34, 2
      %s41 = sadd.s32 %s34, 1
      %s42 = ssub.s32 %s34, %s41
      %p43 = scmp.eq.s32.totalorder %s42, 0
      %s45 = sadd.s32 %s44, 1
      %s46 = scalar_select %p43, %s44, %s45
      %p49 = pneg %p43
      %p50 = scmp.eq.s32.totalorder %s34, 1
      %p51 = por %p49, %p50
      %p52 = scmp.ne.s32.totalorder %s44, %s47
      %p53 = scmp.eq.s32.totalorder %s34, 0
      %p54 = por %p52, %p53
      %p55 = scmp.ne.s32.totalorder %s44, %s47
      %p56 = scmp.eq.s32.totalorder %s39, 1
      %p57 = por %p55, %p56
      %p58 = scmp.ne.s32.totalorder %s47, %s48
      %p59 = scmp.eq.s32.totalorder %s39, 0
      %p60 = por %p58, %p59
      %p61 = scmp.ne.s32.totalorder %s47, %s48
      %p62 = scmp.eq.s32.totalorder %s40, 1
      %p63 = por %p61, %p62
      %p65 = scmp.ne.s32.totalorder %s48, %s64
      %p66 = scmp.eq.s32.totalorder %s40, 0
      %p67 = por %p65, %p66
      %s68 = ssub.s32 %s34, %s41
      %p69 = scmp.eq.s32.totalorder %s68, 0
      %s71 = sadd.s32 %s70, 1
      %s72 = scalar_select %p69, %s70, %s71
      %p75 = pneg %p69
      %p76 = scmp.eq.s32.totalorder %s34, 1
      %p77 = por %p75, %p76
      %p78 = scmp.ne.s32.totalorder %s70, %s73
      %p79 = scmp.eq.s32.totalorder %s34, 0
      %p80 = por %p78, %p79
      %p81 = scmp.ne.s32.totalorder %s70, %s73
      %p82 = scmp.eq.s32.totalorder %s39, 1
      %p83 = por %p81, %p82
      %p84 = scmp.ne.s32.totalorder %s73, %s74
      %p85 = scmp.eq.s32.totalorder %s39, 0
      %p86 = por %p84, %p85
      %p87 = scmp.ne.s32.totalorder %s73, %s74
      %p88 = scmp.eq.s32.totalorder %s40, 1
      %p89 = por %p87, %p88
      %p91 = scmp.ne.s32.totalorder %s74, %s90
      %p92 = scmp.eq.s32.totalorder %s40, 0
      %p93 = por %p91, %p92
      %s94 = ssub.s32 %s34, %s41
      %p95 = scmp.eq.s32.totalorder %s94, 0
      %s97 = sadd.s32 %s96, 1
      %s98 = scalar_select %p95, %s96, %s97
      %p101 = pneg %p95
      %p102 = scmp.eq.s32.totalorder %s34, 1
      %p103 = por %p101, %p102
      %p104 = scmp.ne.s32.totalorder %s96, %s99
      %p105 = scmp.eq.s32.totalorder %s34, 0
      %p106 = por %p104, %p105
      %p107 = scmp.ne.s32.totalorder %s96, %s99
      %p108 = scmp.eq.s32.totalorder %s39, 1
      %p109 = por %p107, %p108
      %p110 = scmp.ne.s32.totalorder %s99, %s100
      %p111 = scmp.eq.s32.totalorder %s39, 0
      %p112 = por %p110, %p111
      %p113 = scmp.ne.s32.totalorder %s99, %s100
      %p114 = scmp.eq.s32.totalorder %s40, 1
      %p115 = por %p113, %p114
      %p117 = scmp.ne.s32.totalorder %s100, %s116
      %p118 = scmp.eq.s32.totalorder %s40, 0
      %p119 = por %p117, %p118
      %s120 = ssub.s32 %s34, %s41
      %p121 = scmp.eq.s32.totalorder %s120, 0
      %s123 = sadd.s32 %s122, 1
      %s124 = scalar_select %p121, %s122, %s123
      %p127 = pneg %p121
      %p128 = scmp.eq.s32.totalorder %s34, 1
      %p129 = por %p127, %p128
      %p130 = scmp.ne.s32.totalorder %s122, %s125
      %p131 = scmp.eq.s32.totalorder %s34, 0
      %p132 = por %p130, %p131
      %p133 = scmp.ne.s32.totalorder %s122, %s125
      %p134 = scmp.eq.s32.totalorder %s39, 1
      %p135 = por %p133, %p134
      %p136 = scmp.ne.s32.totalorder %s125, %s126
      %p137 = scmp.eq.s32.totalorder %s39, 0
      %p138 = por %p136, %p137
      %p139 = scmp.ne.s32.totalorder %s125, %s126
      %p140 = scmp.eq.s32.totalorder %s40, 1
      %p141 = por %p139, %p140
      %p143 = scmp.ne.s32.totalorder %s126, %s142
      %p144 = scmp.eq.s32.totalorder %s40, 0
      %p145 = por %p143, %p144
      %s147 = sadd.s32 %s146, 1
      %p150 = scmp.eq.s32.totalorder %s34, 1
      %p151 = scmp.ne.s32.totalorder %s146, %s148
      %p152 = scmp.eq.s32.totalorder %s34, 0
      %p153 = por %p151, %p152
      %p154 = scmp.ne.s32.totalorder %s146, %s148
      %p155 = scmp.eq.s32.totalorder %s39, 1
      %p156 = por %p154, %p155
      %p157 = scmp.ne.s32.totalorder %s148, %s149
      %p158 = scmp.eq.s32.totalorder %s39, 0
      %p159 = por %p157, %p158
      %p160 = scmp.ne.s32.totalorder %s148, %s149
      %p161 = scmp.eq.s32.totalorder %s40, 1
      %p162 = por %p160, %p161
      %p164 = scmp.ne.s32.totalorder %s149, %s163
      %p165 = scmp.eq.s32.totalorder %s40, 0
      %p166 = por %p164, %p165
      %s168 = sadd.s32 %s167, 1
      %p171 = scmp.eq.s32.totalorder %s34, 1
      %p172 = scmp.ne.s32.totalorder %s167, %s169
      %p173 = scmp.eq.s32.totalorder %s34, 0
      %p174 = por %p172, %p173
      %p175 = scmp.ne.s32.totalorder %s167, %s169
      %p176 = scmp.eq.s32.totalorder %s39, 1
      %p177 = por %p175, %p176
      %p178 = scmp.ne.s32.totalorder %s169, %s170
      %p179 = scmp.eq.s32.totalorder %s39, 0
      %p180 = por %p178, %p179
      %p181 = scmp.ne.s32.totalorder %s169, %s170
      %p182 = scmp.eq.s32.totalorder %s40, 1
      %p183 = por %p181, %p182
      %p185 = scmp.ne.s32.totalorder %s170, %s184
      %p186 = scmp.eq.s32.totalorder %s40, 0
      %p187 = por %p185, %p186
      %s189 = sadd.s32 %s188, 1
      %p192 = scmp.eq.s32.totalorder %s34, 1
      %p193 = scmp.ne.s32.totalorder %s188, %s190
      %p194 = scmp.eq.s32.totalorder %s34, 0
      %p195 = por %p193, %p194
      %p196 = scmp.ne.s32.totalorder %s188, %s190
      %p197 = scmp.eq.s32.totalorder %s39, 1
      %p198 = por %p196, %p197
      %p199 = scmp.ne.s32.totalorder %s190, %s191
      %p200 = scmp.eq.s32.totalorder %s39, 0
      %p201 = por %p199, %p200
      %p202 = scmp.ne.s32.totalorder %s190, %s191
      %p203 = scmp.eq.s32.totalorder %s40, 1
      %p204 = por %p202, %p203
      %p206 = scmp.ne.s32.totalorder %s191, %s205
      %p207 = scmp.eq.s32.totalorder %s40, 0
      %p208 = por %p206, %p207
      %s210 = sadd.s32 %s209, 1
      %p213 = scmp.eq.s32.totalorder %s34, 1
      %p214 = scmp.ne.s32.totalorder %s209, %s211
      %p215 = scmp.eq.s32.totalorder %s34, 0
      %p216 = por %p214, %p215
      %p217 = scmp.ne.s32.totalorder %s209, %s211
      %p218 = scmp.eq.s32.totalorder %s39, 1
      %p219 = por %p217, %p218
      %p220 = scmp.ne.s32.totalorder %s211, %s212
      %p221 = scmp.eq.s32.totalorder %s39, 0
      %p222 = por %p220, %p221
      %p223 = scmp.ne.s32.totalorder %s211, %s212
      %p224 = scmp.eq.s32.totalorder %s40, 1
      %p225 = por %p223, %p224
      %p227 = scmp.ne.s32.totalorder %s212, %s226
      %p228 = scmp.eq.s32.totalorder %s40, 0
      %p229 = por %p227, %p228
      %s230 = ssub.s32 %s34, %s41
      %p231 = scmp.eq.s32.totalorder %s230, 0
      %s233 = sadd.s32 %s232, 1
      %s234 = scalar_select %p231, %s232, %s233
      %p237 = pneg %p231
      %p238 = scmp.eq.s32.totalorder %s34, 1
      %p239 = por %p237, %p238
      %p240 = scmp.ne.s32.totalorder %s232, %s235
      %p241 = scmp.eq.s32.totalorder %s34, 0
      %p242 = por %p240, %p241
      %p243 = scmp.ne.s32.totalorder %s232, %s235
      %p244 = scmp.eq.s32.totalorder %s39, 1
      %p245 = por %p243, %p244
      %p246 = scmp.ne.s32.totalorder %s235, %s236
      %p247 = scmp.eq.s32.totalorder %s39, 0
      %p248 = por %p246, %p247
      %p249 = scmp.ne.s32.totalorder %s235, %s236
      %p250 = scmp.eq.s32.totalorder %s40, 1
      %p251 = por %p249, %p250
      %p253 = scmp.ne.s32.totalorder %s236, %s252
      %p254 = scmp.eq.s32.totalorder %s40, 0
      %p255 = por %p253, %p254
      %s256 = ssub.s32 %s34, %s41
      %p257 = scmp.eq.s32.totalorder %s256, 0
      %s259 = sadd.s32 %s258, 1
      %s260 = scalar_select %p257, %s258, %s259
      %p263 = pneg %p257
      %p264 = scmp.eq.s32.totalorder %s34, 1
      %p265 = por %p263, %p264
      %p266 = scmp.ne.s32.totalorder %s258, %s261
      %p267 = scmp.eq.s32.totalorder %s34, 0
      %p268 = por %p266, %p267
      %p269 = scmp.ne.s32.totalorder %s258, %s261
      %p270 = scmp.eq.s32.totalorder %s39, 1
      %p271 = por %p269, %p270
      %p272 = scmp.ne.s32.totalorder %s261, %s262
      %p273 = scmp.eq.s32.totalorder %s39, 0
      %p274 = por %p272, %p273
      %p275 = scmp.ne.s32.totalorder %s261, %s262
      %p276 = scmp.eq.s32.totalorder %s40, 1
      %p277 = por %p275, %p276
      %p279 = scmp.ne.s32.totalorder %s262, %s278
      %p280 = scmp.eq.s32.totalorder %s40, 0
      %p281 = por %p279, %p280
      %s282 = ssub.s32 %s34, %s41
      %p283 = scmp.eq.s32.totalorder %s282, 0
      %s285 = sadd.s32 %s284, 1
      %s286 = scalar_select %p283, %s284, %s285
      %p289 = pneg %p283
      %p290 = scmp.eq.s32.totalorder %s34, 1
      %p291 = por %p289, %p290
      %p292 = scmp.ne.s32.totalorder %s284, %s287
      %p293 = scmp.eq.s32.totalorder %s34, 0
      %p294 = por %p292, %p293
      %p295 = scmp.ne.s32.totalorder %s284, %s287
      %p296 = scmp.eq.s32.totalorder %s39, 1
      %p297 = por %p295, %p296
      %p298 = scmp.ne.s32.totalorder %s287, %s288
      %p299 = scmp.eq.s32.totalorder %s39, 0
      %p300 = por %p298, %p299
      %p301 = scmp.ne.s32.totalorder %s287, %s288
      %p302 = scmp.eq.s32.totalorder %s40, 1
      %p303 = por %p301, %p302
      %p305 = scmp.ne.s32.totalorder %s288, %s304
      %p306 = scmp.eq.s32.totalorder %s40, 0
      %p307 = por %p305, %p306
      %p308 = scmp.le.s32.totalorder 1, %s34
      %p309 = scmp.lt.s32.totalorder %s34, 3
      %p310 = pnand %p308, %p309
      %p311 = pneg %p310
      // Predicated region
      $region9: #{tpu_custom_call.1} parent=5 // pred_check
        _
      $region10: #{tpu_custom_call.1} parent=5 // pred_check_branch
        %313 = sbr.rel (%p310) target = $region12
      $region11: #{tpu_custom_call.1} parent=5 // pred_region
        %s314 = ssub.s32 %s34, 1
        // Predicated region
        $region13: #{tpu_custom_call.1} parent=11 // pred_check
          %p315 = pneg %p159
        $region14: #{tpu_custom_call.1} parent=11 // pred_check_branch
          %317 = sbr.rel (%p315) target = $region16
        $region15: #{tpu_custom_call.1} parent=11 // pred_region
          %319 = vsyncadd [#allocation10], 0
          %s320 = sshll.u32 %s4, 4
          %s321 = int_to_ptr.hbm [resolvable:$true] %s320
          %s322 = sshll.u32 [#allocation11], 4
          %s323 = int_to_ptr.vmem [resolvable:$true] %s322
          %328 = dma.hbm_to_vmem [thread:$0]  %s321, 1536, %s323, [#allocation10], 512, 512, 32
        $region16: #{tpu_custom_call.1} parent=11 // pred_fallthru
          _
        // Predicated region
        $region17: #{tpu_custom_call.1} parent=11 // pred_check
          %p329 = pneg %p180
        $region18: #{tpu_custom_call.1} parent=11 // pred_check_branch
          %331 = sbr.rel (%p329) target = $region20
        $region19: #{tpu_custom_call.1} parent=11 // pred_region
          %333 = vsyncadd [#allocation13], 0
          %s334 = sshll.u32 %s5, 4
          %s335 = int_to_ptr.hbm [resolvable:$true] %s334
          %s336 = sshll.u32 [#allocation12], 4
          %s337 = int_to_ptr.vmem [resolvable:$true] %s336
          %342 = dma.hbm_to_vmem [thread:$0]  %s335, 8192, %s337, [#allocation13], 256, 256, 16
        $region20: #{tpu_custom_call.1} parent=11 // pred_fallthru
          _
        // Predicated region
        $region21: #{tpu_custom_call.1} parent=11 // pred_check
          %p343 = pneg %p201
        $region22: #{tpu_custom_call.1} parent=11 // pred_check_branch
          %345 = sbr.rel (%p343) target = $region24
        $region23: #{tpu_custom_call.1} parent=11 // pred_region
          %347 = vsyncadd [#allocation13], 0
          %s348 = sshll.u32 %s6, 4
          %s349 = int_to_ptr.hbm [resolvable:$true] %s348
          %s350 = sshll.u32 [#allocation14], 4
          %s351 = int_to_ptr.vmem [resolvable:$true] %s350
          %356 = dma.hbm_to_vmem [thread:$0]  %s349, 8192, %s351, [#allocation13], 256, 256, 16
        $region24: #{tpu_custom_call.1} parent=11 // pred_fallthru
          _
        // Predicated region
        $region25: #{tpu_custom_call.1} parent=11 // pred_check
          %p357 = pneg %p222
        $region26: #{tpu_custom_call.1} parent=11 // pred_check_branch
          %359 = sbr.rel (%p357) target = $region28
        $region27: #{tpu_custom_call.1} parent=11 // pred_region
          %361 = vsyncadd [#allocation16], 0
          %s362 = sshll.u32 %s7, 4
          %s363 = int_to_ptr.hbm [resolvable:$true] %s362
          %s364 = sshll.u32 [#allocation15], 4
          %s365 = int_to_ptr.vmem [resolvable:$true] %s364
          %370 = dma.hbm_to_vmem [thread:$0]  %s363, 8192, %s365, [#allocation16], 256, 256, 16
        $region28: #{tpu_custom_call.1} parent=11 // pred_fallthru
          _
      $region12: #{tpu_custom_call.1} parent=5 // pred_fallthru
        _
      %p371 = scmp.lt.s32.totalorder %s34, 2
      // Predicated region
      $region29: #{tpu_custom_call.1} parent=5 // pred_check
        %p372 = pneg %p371
      $region30: #{tpu_custom_call.1} parent=5 // pred_check_branch
        %374 = sbr.rel (%p372) target = $region32
      $region31: #{tpu_custom_call.1} parent=5 // pred_region
        // Predicated region
        $region33: #{tpu_custom_call.1} parent=31 // pred_check
          %p375 = pneg %p54
        $region34: #{tpu_custom_call.1} parent=31 // pred_check_branch
          %377 = sbr.rel (%p375) target = $region36
        $region35: #{tpu_custom_call.1} parent=31 // pred_region
          %s378 = sand.u32 %s44, 1
          %s379 = scalar_lea.sflag [#allocation4], %s378
          %s380 = sand.u32 %s44, 1
          %s381 = smul.addr %s380, 4
          %s382 = scalar_lea.vmem [#allocation3], %s381
          %384 = vsyncadd %s379, 0
          %s385 = smul.addr %s34, 4
          %s386 = scalar_lea.hbm %s0, %s385
          %s388 = sshll.u32 %s386, 4
          %s389 = int_to_ptr.hbm [resolvable:$true] %s388
          %s390 = sshll.u32 %s382, 4
          %s391 = int_to_ptr.vmem [resolvable:$true] %s390
          %393 = dma.hbm_to_vmem [thread:$0]  %s389, 64, %s391, %s379
        $region36: #{tpu_custom_call.1} parent=31 // pred_fallthru
          _
        // Predicated region
        $region37: #{tpu_custom_call.1} parent=31 // pred_check
          %p394 = pneg %p80
        $region38: #{tpu_custom_call.1} parent=31 // pred_check_branch
          %396 = sbr.rel (%p394) target = $region40
        $region39: #{tpu_custom_call.1} parent=31 // pred_region
          %s397 = sand.u32 %s34, 1
          %s398 = scalar_lea.sflag [#allocation7], %s397
          %s399 = sand.u32 %s70, 1
          %s400 = smul.addr %s399, 8
          %s401 = scalar_lea.vmem [#allocation6], %s400
          %403 = vsyncadd %s398, 0
          %s404 = smul.addr %s34, 8
          %s405 = scalar_lea.hbm %s1, %s404
          %s407 = sshll.u32 %s405, 4
          %s408 = int_to_ptr.hbm [resolvable:$true] %s407
          %s409 = sshll.u32 %s401, 4
          %s410 = int_to_ptr.vmem [resolvable:$true] %s409
          %412 = dma.hbm_to_vmem [thread:$0]  %s408, 128, %s410, %s398
        $region40: #{tpu_custom_call.1} parent=31 // pred_fallthru
          _
        // Predicated region
        $region41: #{tpu_custom_call.1} parent=31 // pred_check
          %p413 = pneg %p106
        $region42: #{tpu_custom_call.1} parent=31 // pred_check_branch
          %415 = sbr.rel (%p413) target = $region44
        $region43: #{tpu_custom_call.1} parent=31 // pred_region
          %s416 = sand.u32 %s34, 1
          %s417 = scalar_lea.sflag [#allocation7], %s416
          %s418 = sand.u32 %s96, 1
          %s419 = smul.addr %s418, 8
          %s420 = scalar_lea.vmem [#allocation8], %s419
          %422 = vsyncadd %s417, 0
          %s423 = smul.addr %s34, 8
          %s424 = scalar_lea.hbm %s2, %s423
          %s426 = sshll.u32 %s424, 4
          %s427 = int_to_ptr.hbm [resolvable:$true] %s426
          %s428 = sshll.u32 %s420, 4
          %s429 = int_to_ptr.vmem [resolvable:$true] %s428
          %431 = dma.hbm_to_vmem [thread:$0]  %s427, 128, %s429, %s417
        $region44: #{tpu_custom_call.1} parent=31 // pred_fallthru
          _
        // Predicated region
        $region45: #{tpu_custom_call.1} parent=31 // pred_check
          %p432 = pneg %p132
        $region46: #{tpu_custom_call.1} parent=31 // pred_check_branch
          %434 = sbr.rel (%p432) target = $region48
        $region47: #{tpu_custom_call.1} parent=31 // pred_region
          %s435 = sand.u32 %s34, 1
          %s436 = scalar_lea.sflag [#allocation10], %s435
          %s437 = sand.u32 %s122, 1
          %s438 = smul.addr %s437, 8
          %s439 = scalar_lea.vmem [#allocation9], %s438
          %441 = vsyncadd %s436, 0
          %s442 = smul.addr %s34, 8
          %s443 = scalar_lea.hbm %s3, %s442
          %s445 = sshll.u32 %s443, 4
          %s446 = int_to_ptr.hbm [resolvable:$true] %s445
          %s447 = sshll.u32 %s439, 4
          %s448 = int_to_ptr.vmem [resolvable:$true] %s447
          %450 = dma.hbm_to_vmem [thread:$0]  %s446, 128, %s448, %s436
        $region48: #{tpu_custom_call.1} parent=31 // pred_fallthru
          _
      $region32: #{tpu_custom_call.1} parent=5 // pred_fallthru
        _
      %p451 = scmp.le.s32.totalorder 1, %s34
      %p452 = scmp.lt.s32.totalorder %s34, 3
      %p453 = pnand %p451, %p452
      %p454 = pneg %p453
      // Predicated region
      $region49: #{tpu_custom_call.1} parent=5 // pred_check
        _
      $region50: #{tpu_custom_call.1} parent=5 // pred_check_branch
        %456 = sbr.rel (%p453) target = $region52
      $region51: #{tpu_custom_call.1} parent=5 // pred_region
        %s457 = ssub.s32 %s34, 1
        %s458 = sand.u32 %s47, 1
        %s459 = scalar_lea.sflag [#allocation4], %s458
        %s460 = sand.u32 %s47, 1
        %s461 = smul.addr %s460, 4
        %s462 = scalar_lea.vmem [#allocation3], %s461
        // Predicated region
        $region53: #{tpu_custom_call.1} parent=51 // pred_check
          %p463 = pneg %p60
        $region54: #{tpu_custom_call.1} parent=51 // pred_check_branch
          %465 = sbr.rel (%p463) target = $region56
        $region55: #{tpu_custom_call.1} parent=51 // pred_region
          %467 = dma.done %s459, 64
        $region56: #{tpu_custom_call.1} parent=51 // pred_fallthru
          _
        %s468 = sand.u32 %s39, 1
        %s469 = scalar_lea.sflag [#allocation7], %s468
        %s470 = sand.u32 %s73, 1
        %s471 = smul.addr %s470, 8
        %s472 = scalar_lea.vmem [#allocation6], %s471
        // Predicated region
        $region57: #{tpu_custom_call.1} parent=51 // pred_check
          %p473 = pneg %p86
        $region58: #{tpu_custom_call.1} parent=51 // pred_check_branch
          %475 = sbr.rel (%p473) target = $region60
        $region59: #{tpu_custom_call.1} parent=51 // pred_region
          %477 = dma.done %s469, 128
        $region60: #{tpu_custom_call.1} parent=51 // pred_fallthru
          _
        %s478 = sand.u32 %s39, 1
        %s479 = scalar_lea.sflag [#allocation7], %s478
        %s480 = sand.u32 %s99, 1
        %s481 = smul.addr %s480, 8
        %s482 = scalar_lea.vmem [#allocation8], %s481
        // Predicated region
        $region61: #{tpu_custom_call.1} parent=51 // pred_check
          %p483 = pneg %p112
        $region62: #{tpu_custom_call.1} parent=51 // pred_check_branch
          %485 = sbr.rel (%p483) target = $region64
        $region63: #{tpu_custom_call.1} parent=51 // pred_region
          %487 = dma.done %s479, 128
        $region64: #{tpu_custom_call.1} parent=51 // pred_fallthru
          _
        %s488 = sand.u32 %s39, 1
        %s489 = scalar_lea.sflag [#allocation10], %s488
        %s490 = sand.u32 %s125, 1
        %s491 = smul.addr %s490, 8
        %s492 = scalar_lea.vmem [#allocation9], %s491
        // Predicated region
        $region65: #{tpu_custom_call.1} parent=51 // pred_check
          %p493 = pneg %p138
        $region66: #{tpu_custom_call.1} parent=51 // pred_check_branch
          %495 = sbr.rel (%p493) target = $region68
        $region67: #{tpu_custom_call.1} parent=51 // pred_region
          %497 = dma.done %s489, 128
        $region68: #{tpu_custom_call.1} parent=51 // pred_fallthru
          _
        // Predicated region
        $region69: #{tpu_custom_call.1} parent=51 // pred_check
          %p498 = pneg %p159
        $region70: #{tpu_custom_call.1} parent=51 // pred_check_branch
          %500 = sbr.rel (%p498) target = $region72
        $region71: #{tpu_custom_call.1} parent=51 // pred_region
          %502 = dma.done [#allocation10], 1536
        $region72: #{tpu_custom_call.1} parent=51 // pred_fallthru
          _
        // Predicated region
        $region73: #{tpu_custom_call.1} parent=51 // pred_check
          %p503 = pneg %p180
        $region74: #{tpu_custom_call.1} parent=51 // pred_check_branch
          %505 = sbr.rel (%p503) target = $region76
        $region75: #{tpu_custom_call.1} parent=51 // pred_region
          %507 = dma.done [#allocation13], 8192
        $region76: #{tpu_custom_call.1} parent=51 // pred_fallthru
          _
        // Predicated region
        $region77: #{tpu_custom_call.1} parent=51 // pred_check
          %p508 = pneg %p201
        $region78: #{tpu_custom_call.1} parent=51 // pred_check_branch
          %510 = sbr.rel (%p508) target = $region80
        $region79: #{tpu_custom_call.1} parent=51 // pred_region
          %512 = dma.done [#allocation13], 8192
        $region80: #{tpu_custom_call.1} parent=51 // pred_fallthru
          _
        // Predicated region
        $region81: #{tpu_custom_call.1} parent=51 // pred_check
          %p513 = pneg %p222
        $region82: #{tpu_custom_call.1} parent=51 // pred_check_branch
          %515 = sbr.rel (%p513) target = $region84
        $region83: #{tpu_custom_call.1} parent=51 // pred_region
          %517 = dma.done [#allocation16], 8192
        $region84: #{tpu_custom_call.1} parent=51 // pred_fallthru
          _
        %s518 = sand.u32 %s47, 1
        %s519 = scalar_lea.sflag [#allocation4], %s518
        %s520 = sand.u32 %s47, 1
        %s521 = smul.addr %s520, 4
        %s522 = scalar_lea.vmem [#allocation3], %s521
        %p523 = pneg %p60
        %p524 = pneg %p57
        %s525 = sand.u32 %s39, 1
        %s526 = scalar_lea.sflag [#allocation7], %s525
        %s527 = sand.u32 %s73, 1
        %s528 = smul.addr %s527, 8
        %s529 = scalar_lea.vmem [#allocation6], %s528
        %p530 = pneg %p86
        %p531 = pneg %p83
        %s532 = sand.u32 %s39, 1
        %s533 = scalar_lea.sflag [#allocation7], %s532
        %s534 = sand.u32 %s99, 1
        %s535 = smul.addr %s534, 8
        %s536 = scalar_lea.vmem [#allocation8], %s535
        %p537 = pneg %p112
        %p538 = pneg %p109
        %s539 = sand.u32 %s39, 1
        %s540 = scalar_lea.sflag [#allocation10], %s539
        %s541 = sand.u32 %s125, 1
        %s542 = smul.addr %s541, 8
        %s543 = scalar_lea.vmem [#allocation9], %s542
        %p544 = pneg %p138
        %p545 = pneg %p135
        %p546 = pneg %p159
        %p547 = pneg %p156
        %p548 = pneg %p180
        %p549 = pneg %p177
        %p550 = pneg %p201
        %p551 = pneg %p198
        %p552 = pneg %p222
        %p553 = pneg %p219
        %p554 = pneg %p248
        %p555 = pneg %p245
        %s556 = sand.u32 %s235, 1
        %s557 = scalar_lea.sflag [#allocation5], %s556
        %s558 = sand.u32 %s235, 1
        %s559 = smul.addr %s558, 16
        %s560 = scalar_lea.vmem [#allocation17], %s559
        %p561 = pneg %p274
        %p562 = pneg %p271
        %s563 = sand.u32 %s39, 1
        %s564 = scalar_lea.sflag [#allocation19], %s563
        %s565 = sand.u32 %s261, 1
        %s566 = smul.addr %s565, 16
        %s567 = scalar_lea.vmem [#allocation18], %s566
        %p568 = pneg %p300
        %p569 = pneg %p297
        %s570 = sand.u32 %s39, 1
        %s571 = scalar_lea.sflag [#allocation19], %s570
        %s572 = sand.u32 %s287, 1
        %s573 = smul.addr %s572, 16
        %s574 = scalar_lea.vmem [#allocation20], %s573
        %v575 = vld [vmem:[%s462] sm:$0xf]
        %v576 = vld [vmem:[#allocation11] sm:$0xff]
        %v577 = vld [vmem:[#allocation11 + $0x8] sm:$0xff]
        %v578 = vld [vmem:[#allocation11 + $0x10] sm:$0xff]
        %v579 = vld [vmem:[#allocation11 + $0x18] sm:$0xff]
        %v580 = vld [vmem:[#allocation11 + $0x40] ss:$0 sm:$0xff]
        %v582 = vperm.slane %v575, 0
        %v583 = vperm.slane %v575, 1
        %v584 = vperm.slane %v575, 2
        %v585 = vperm.slane %v575, 3
        %590 = vmatpush.xpose.msra.mxu0 0.0
        %591 = vmatpush.xpose.msra.mxu0 0.0
        %592 = vmatpush.xpose.msra.mxu0 0.0
        %593 = vmatpush.xpose.msra.mxu0 0.0
        %594 = vmatpush.xpose.msra.mxu0 0.0
        %595 = vmatpush.xpose.msra.mxu0 0.0
        %596 = vmatpush.xpose.msra.mxu0 0.0
        %597 = vmatpush.xpose.msra.mxu0 0.0
        %598 = vmatpush.xpose.msra.mxu0 0.0
        %599 = vmatpush.xpose.msra.mxu0 0.0
        %600 = vmatpush.xpose.msra.mxu0 0.0
        %601 = vmatpush.xpose.msra.mxu0 0.0
        %602 = vmatpush.xpose.msra.mxu0 0.0
        %603 = vmatpush.xpose.msra.mxu0 0.0
        %604 = vmatpush.xpose.msra.mxu0 0.0
        %605 = vmatpush.xpose.msra.mxu0 %v576
        %606 = vmatmul.f32.gmra.mxu0 %v582
        %v607 = vpop.f32.mrf.mxu0
        %v608 = vadd.f32 %v580, %v607
        %609 = vdwg.mxu0
        %610 = vmatpush.xpose.msra.mxu0 0.0
        %611 = vmatpush.xpose.msra.mxu0 0.0
        %612 = vmatpush.xpose.msra.mxu0 0.0
        %613 = vmatpush.xpose.msra.mxu0 0.0
        %614 = vmatpush.xpose.msra.mxu0 0.0
        %615 = vmatpush.xpose.msra.mxu0 0.0
        %616 = vmatpush.xpose.msra.mxu0 0.0
        %617 = vmatpush.xpose.msra.mxu0 0.0
        %618 = vmatpush.xpose.msra.mxu0 0.0
        %619 = vmatpush.xpose.msra.mxu0 0.0
        %620 = vmatpush.xpose.msra.mxu0 0.0
        %621 = vmatpush.xpose.msra.mxu0 0.0
        %622 = vmatpush.xpose.msra.mxu0 0.0
        %623 = vmatpush.xpose.msra.mxu0 0.0
        %624 = vmatpush.xpose.msra.mxu0 0.0
        %625 = vmatpush.xpose.msra.mxu0 %v577
        %626 = vmatmul.f32.gmra.mxu0 %v583
        %v627 = vpop.f32.mrf.mxu0
        %v628 = vadd.f32 %v608, %v627
        %629 = vdwg.mxu0
        %630 = vmatpush.xpose.msra.mxu0 0.0
        %631 = vmatpush.xpose.msra.mxu0 0.0
        %632 = vmatpush.xpose.msra.mxu0 0.0
        %633 = vmatpush.xpose.msra.mxu0 0.0
        %634 = vmatpush.xpose.msra.mxu0 0.0
        %635 = vmatpush.xpose.msra.mxu0 0.0
        %636 = vmatpush.xpose.msra.mxu0 0.0
        %637 = vmatpush.xpose.msra.mxu0 0.0
        %638 = vmatpush.xpose.msra.mxu0 0.0
        %639 = vmatpush.xpose.msra.mxu0 0.0
        %640 = vmatpush.xpose.msra.mxu0 0.0
        %641 = vmatpush.xpose.msra.mxu0 0.0
        %642 = vmatpush.xpose.msra.mxu0 0.0
        %643 = vmatpush.xpose.msra.mxu0 0.0
        %644 = vmatpush.xpose.msra.mxu0 0.0
        %645 = vmatpush.xpose.msra.mxu0 %v578
        %646 = vmatmul.f32.gmra.mxu0 %v584
        %v647 = vpop.f32.mrf.mxu0
        %v648 = vadd.f32 %v628, %v647
        %649 = vdwg.mxu0
        %650 = vmatpush.xpose.msra.mxu0 0.0
        %651 = vmatpush.xpose.msra.mxu0 0.0
        %652 = vmatpush.xpose.msra.mxu0 0.0
        %653 = vmatpush.xpose.msra.mxu0 0.0
        %654 = vmatpush.xpose.msra.mxu0 0.0
        %655 = vmatpush.xpose.msra.mxu0 0.0
        %656 = vmatpush.xpose.msra.mxu0 0.0
        %657 = vmatpush.xpose.msra.mxu0 0.0
        %658 = vmatpush.xpose.msra.mxu0 0.0
        %659 = vmatpush.xpose.msra.mxu0 0.0
        %660 = vmatpush.xpose.msra.mxu0 0.0
        %661 = vmatpush.xpose.msra.mxu0 0.0
        %662 = vmatpush.xpose.msra.mxu0 0.0
        %663 = vmatpush.xpose.msra.mxu0 0.0
        %664 = vmatpush.xpose.msra.mxu0 0.0
        %665 = vmatpush.xpose.msra.mxu0 %v579
        %666 = vmatmul.f32.gmra.mxu0 %v585
        %v667 = vpop.f32.mrf.mxu0
        %v668 = vadd.f32 %v648, %v667
        %669 = vdwg.mxu0
        %v670 = vmax.f32 %v668, 0.0
        %v671 = vld [vmem:[#allocation11 + $0x20] sm:$0xff]
        %v672 = vld [vmem:[#allocation11 + $0x41] ss:$0 sm:$0xff]
        %vm673 = vcmask 64512
        %v675 = vsel %vm673, %v670, 0
        %677 = vmatpush.msra.mxu0 0.0
        %678 = vmatpush.msra.mxu0 0.0
        %679 = vmatpush.msra.mxu0 0.0
        %680 = vmatpush.msra.mxu0 0.0
        %681 = vmatpush.msra.mxu0 0.0
        %682 = vmatpush.msra.mxu0 0.0
        %683 = vmatpush.msra.mxu0 0.0
        %684 = vmatpush.msra.mxu0 0.0
        %685 = vmatpush.msra.mxu0 0.0
        %686 = vmatpush.msra.mxu0 0.0
        %687 = vmatpush.msra.mxu0 0.0
        %688 = vmatpush.msra.mxu0 0.0
        %689 = vmatpush.msra.mxu0 0.0
        %690 = vmatpush.msra.mxu0 0.0
        %691 = vmatpush.msra.mxu0 0.0
        %692 = vmatpush.msra.mxu0 %v671
        %693 = vmatmul.f32.gmra.mxu0 %v675
        %v694 = vpop.f32.mrf.mxu0
        %v695 = vadd.f32 %v672, %v694
        %696 = vdwg.mxu0
        %v697 = vxor.u32 %v695, 2147483648
        %v698 = vmul.f32 %v697, 1.442695
        %v699 = vpow.pop %v698
        %v700 = vadd.f32 %v699, 1.0
        %v701 = vrcp.pop %v700
        %v702 = vmul.f32 %v700, %v701
        %v703 = vsub.f32 1.0, %v702
        %v704 = vmul.f32 %v701, %v703
        %v705 = vadd.f32 %v701, %v704
        %vm706 = vweird.f32 %v700
        %vm707 = vweird.f32 %v701
        %vm708 = vmor %vm706, %vm707
        %v709 = vsel %vm708, %v701, %v705
        %v710 = vand.u32 2147483647, %v700
        %vm711 = vcmp.eq.f32.partialorder %v710, 8.507059e+37
        %v712 = vand.u32 %v700, 2147483648
        %v713 = vor.u32 1.1754944e-38, %v712
        %v714 = vsel %vm711, %v713, %v709
        %v715 = vmul.f32 1.0, %v714
        %vm716 = vcmask 57344
        %717 = vst.msk [vmem:[#allocation2] sm:$0x1] %vm716, %v715
        %v718 = vld [vmem:[#allocation2] sm:$0x1]
        %v719 = vld [vmem:[#allocation12] sm:$0xff]
        %v720 = vld [vmem:[#allocation12 + $0x8] sm:$0xff]
        %v721 = vld [vmem:[#allocation12 + $0x10] sm:$0xff]
        %v722 = vld [vmem:[#allocation12 + $0x18] sm:$0xff]
        %v723 = vld [vmem:[#allocation12 + $0x20] sm:$0xff]
        %v724 = vld [vmem:[#allocation12 + $0x28] sm:$0xff]
        %v725 = vld [vmem:[#allocation12 + $0x30] sm:$0xff]
        %v726 = vld [vmem:[#allocation12 + $0x38] sm:$0xff]
        %v727 = vld [vmem:[#allocation12 + $0x40] sm:$0xff]
        %v728 = vld [vmem:[#allocation12 + $0x48] sm:$0xff]
        %v729 = vld [vmem:[#allocation12 + $0x50] sm:$0xff]
        %v730 = vld [vmem:[#allocation12 + $0x58] sm:$0xff]
        %v731 = vld [vmem:[#allocation12 + $0x60] sm:$0xff]
        %v732 = vld [vmem:[#allocation12 + $0x68] sm:$0xff]
        %v733 = vld [vmem:[#allocation12 + $0x70] sm:$0xff]
        %v734 = vld [vmem:[#allocation12 + $0x78] sm:$0xff]
        %v736 = vperm.slane %v718, 0
        %737 = vset.pattern.permute.xlu0 0
        %738 = vperm.xlu0 %737, %v736
        %v739 = vpop.permute.xlu0 %738
        %v741 = vmul.f32 %v739, %v719
        %v742 = vmul.f32 %v739, %v720
        %v743 = vmul.f32 %v739, %v721
        %v744 = vmul.f32 %v739, %v722
        %v745 = vmul.f32 %v739, %v723
        %v746 = vmul.f32 %v739, %v724
        %v747 = vmul.f32 %v739, %v725
        %v748 = vmul.f32 %v739, %v726
        %v749 = vmul.f32 %v739, %v727
        %v750 = vmul.f32 %v739, %v728
        %v751 = vmul.f32 %v739, %v729
        %v752 = vmul.f32 %v739, %v730
        %v753 = vmul.f32 %v739, %v731
        %v754 = vmul.f32 %v739, %v732
        %v755 = vmul.f32 %v739, %v733
        %v756 = vmul.f32 %v739, %v734
        %s757 = scalar_lea.vmem [#allocation12], 128
        %v758 = vld [vmem:[%s757] sm:$0xff]
        %v759 = vld [vmem:[%s757 + $0x8] sm:$0xff]
        %v760 = vld [vmem:[%s757 + $0x10] sm:$0xff]
        %v761 = vld [vmem:[%s757 + $0x18] sm:$0xff]
        %v762 = vld [vmem:[%s757 + $0x20] sm:$0xff]
        %v763 = vld [vmem:[%s757 + $0x28] sm:$0xff]
        %v764 = vld [vmem:[%s757 + $0x30] sm:$0xff]
        %v765 = vld [vmem:[%s757 + $0x38] sm:$0xff]
        %v766 = vld [vmem:[%s757 + $0x40] sm:$0xff]
        %v767 = vld [vmem:[%s757 + $0x48] sm:$0xff]
        %v768 = vld [vmem:[%s757 + $0x50] sm:$0xff]
        %v769 = vld [vmem:[%s757 + $0x58] sm:$0xff]
        %v770 = vld [vmem:[%s757 + $0x60] sm:$0xff]
        %v771 = vld [vmem:[%s757 + $0x68] sm:$0xff]
        %v772 = vld [vmem:[%s757 + $0x70] sm:$0xff]
        %v773 = vld [vmem:[%s757 + $0x78] sm:$0xff]
        %774 = vset.pattern.permute.xlu0 1
        %775 = vperm.xlu0 %774, %v736
        %v776 = vpop.permute.xlu0 %775
        %v778 = vmul.f32 %v776, %v758
        %v779 = vmul.f32 %v776, %v759
        %v780 = vmul.f32 %v776, %v760
        %v781 = vmul.f32 %v776, %v761
        %v782 = vmul.f32 %v776, %v762
        %v783 = vmul.f32 %v776, %v763
        %v784 = vmul.f32 %v776, %v764
        %v785 = vmul.f32 %v776, %v765
        %v786 = vmul.f32 %v776, %v766
        %v787 = vmul.f32 %v776, %v767
        %v788 = vmul.f32 %v776, %v768
        %v789 = vmul.f32 %v776, %v769
        %v790 = vmul.f32 %v776, %v770
        %v791 = vmul.f32 %v776, %v771
        %v792 = vmul.f32 %v776, %v772
        %v793 = vmul.f32 %v776, %v773
        %v794 = vadd.f32 %v741, %v778
        %v795 = vadd.f32 %v742, %v779
        %v796 = vadd.f32 %v743, %v780
        %v797 = vadd.f32 %v744, %v781
        %v798 = vadd.f32 %v745, %v782
        %v799 = vadd.f32 %v746, %v783
        %v800 = vadd.f32 %v747, %v784
        %v801 = vadd.f32 %v748, %v785
        %v802 = vadd.f32 %v749, %v786
        %v803 = vadd.f32 %v750, %v787
        %v804 = vadd.f32 %v751, %v788
        %v805 = vadd.f32 %v752, %v789
        %v806 = vadd.f32 %v753, %v790
        %v807 = vadd.f32 %v754, %v791
        %v808 = vadd.f32 %v755, %v792
        %v809 = vadd.f32 %v756, %v793
        %s810 = scalar_lea.vmem [#allocation12], 256
        %v811 = vld [vmem:[%s810] sm:$0xff]
        %v812 = vld [vmem:[%s810 + $0x8] sm:$0xff]
        %v813 = vld [vmem:[%s810 + $0x10] sm:$0xff]
        %v814 = vld [vmem:[%s810 + $0x18] sm:$0xff]
        %v815 = vld [vmem:[%s810 + $0x20] sm:$0xff]
        %v816 = vld [vmem:[%s810 + $0x28] sm:$0xff]
        %v817 = vld [vmem:[%s810 + $0x30] sm:$0xff]
        %v818 = vld [vmem:[%s810 + $0x38] sm:$0xff]
        %v819 = vld [vmem:[%s810 + $0x40] sm:$0xff]
        %v820 = vld [vmem:[%s810 + $0x48] sm:$0xff]
        %v821 = vld [vmem:[%s810 + $0x50] sm:$0xff]
        %v822 = vld [vmem:[%s810 + $0x58] sm:$0xff]
        %v823 = vld [vmem:[%s810 + $0x60] sm:$0xff]
        %v824 = vld [vmem:[%s810 + $0x68] sm:$0xff]
        %v825 = vld [vmem:[%s810 + $0x70] sm:$0xff]
        %v826 = vld [vmem:[%s810 + $0x78] sm:$0xff]
        %827 = vset.pattern.permute.xlu0 2
        %828 = vperm.xlu0 %827, %v736
        %v829 = vpop.permute.xlu0 %828
        %v831 = vmul.f32 %v829, %v811
        %v832 = vmul.f32 %v829, %v812
        %v833 = vmul.f32 %v829, %v813
        %v834 = vmul.f32 %v829, %v814
        %v835 = vmul.f32 %v829, %v815
        %v836 = vmul.f32 %v829, %v816
        %v837 = vmul.f32 %v829, %v817
        %v838 = vmul.f32 %v829, %v818
        %v839 = vmul.f32 %v829, %v819
        %v840 = vmul.f32 %v829, %v820
        %v841 = vmul.f32 %v829, %v821
        %v842 = vmul.f32 %v829, %v822
        %v843 = vmul.f32 %v829, %v823
        %v844 = vmul.f32 %v829, %v824
        %v845 = vmul.f32 %v829, %v825
        %v846 = vmul.f32 %v829, %v826
        %v847 = vadd.f32 %v794, %v831
        %v848 = vadd.f32 %v795, %v832
        %v849 = vadd.f32 %v796, %v833
        %v850 = vadd.f32 %v797, %v834
        %v851 = vadd.f32 %v798, %v835
        %v852 = vadd.f32 %v799, %v836
        %v853 = vadd.f32 %v800, %v837
        %v854 = vadd.f32 %v801, %v838
        %v855 = vadd.f32 %v802, %v839
        %v856 = vadd.f32 %v803, %v840
        %v857 = vadd.f32 %v804, %v841
        %v858 = vadd.f32 %v805, %v842
        %v859 = vadd.f32 %v806, %v843
        %v860 = vadd.f32 %v807, %v844
        %v861 = vadd.f32 %v808, %v845
        %v862 = vadd.f32 %v809, %v846
        %s863 = scalar_lea.vmem [#allocation12], 384
        %v864 = vld [vmem:[%s863] sm:$0xff]
        %v865 = vld [vmem:[%s863 + $0x8] sm:$0xff]
        %v866 = vld [vmem:[%s863 + $0x10] sm:$0xff]
        %v867 = vld [vmem:[%s863 + $0x18] sm:$0xff]
        %v868 = vld [vmem:[%s863 + $0x20] sm:$0xff]
        %v869 = vld [vmem:[%s863 + $0x28] sm:$0xff]
        %v870 = vld [vmem:[%s863 + $0x30] sm:$0xff]
        %v871 = vld [vmem:[%s863 + $0x38] sm:$0xff]
        %v872 = vld [vmem:[%s863 + $0x40] sm:$0xff]
        %v873 = vld [vmem:[%s863 + $0x48] sm:$0xff]
        %v874 = vld [vmem:[%s863 + $0x50] sm:$0xff]
        %v875 = vld [vmem:[%s863 + $0x58] sm:$0xff]
        %v876 = vld [vmem:[%s863 + $0x60] sm:$0xff]
        %v877 = vld [vmem:[%s863 + $0x68] sm:$0xff]
        %v878 = vld [vmem:[%s863 + $0x70] sm:$0xff]
        %v879 = vld [vmem:[%s863 + $0x78] sm:$0xff]
        %880 = vset.pattern.permute.xlu0 3
        %881 = vperm.xlu0 %880, %v736
        %v882 = vpop.permute.xlu0 %881
        %v884 = vmul.f32 %v882, %v864
        %v885 = vmul.f32 %v882, %v865
        %v886 = vmul.f32 %v882, %v866
        %v887 = vmul.f32 %v882, %v867
        %v888 = vmul.f32 %v882, %v868
        %v889 = vmul.f32 %v882, %v869
        %v890 = vmul.f32 %v882, %v870
        %v891 = vmul.f32 %v882, %v871
        %v892 = vmul.f32 %v882, %v872
        %v893 = vmul.f32 %v882, %v873
        %v894 = vmul.f32 %v882, %v874
        %v895 = vmul.f32 %v882, %v875
        %v896 = vmul.f32 %v882, %v876
        %v897 = vmul.f32 %v882, %v877
        %v898 = vmul.f32 %v882, %v878
        %v899 = vmul.f32 %v882, %v879
        %v900 = vadd.f32 %v847, %v884
        %v901 = vadd.f32 %v848, %v885
        %v902 = vadd.f32 %v849, %v886
        %v903 = vadd.f32 %v850, %v887
        %v904 = vadd.f32 %v851, %v888
        %v905 = vadd.f32 %v852, %v889
        %v906 = vadd.f32 %v853, %v890
        %v907 = vadd.f32 %v854, %v891
        %v908 = vadd.f32 %v855, %v892
        %v909 = vadd.f32 %v856, %v893
        %v910 = vadd.f32 %v857, %v894
        %v911 = vadd.f32 %v858, %v895
        %v912 = vadd.f32 %v859, %v896
        %v913 = vadd.f32 %v860, %v897
        %v914 = vadd.f32 %v861, %v898
        %v915 = vadd.f32 %v862, %v899
        %v916 = vld [vmem:[%s472] sm:$0xff]
        %vm917 = vcmask 523264
        %v919 = vsel %vm917, %v916, 0
        %921 = vmatpush.msra.mxu0 0.0
        %922 = vmatpush.msra.mxu0 0.0
        %923 = vmatpush.msra.mxu0 0.0
        %924 = vmatpush.msra.mxu0 0.0
        %925 = vmatpush.msra.mxu0 0.0
        %926 = vmatpush.msra.mxu0 0.0
        %927 = vmatpush.msra.mxu0 0.0
        %928 = vmatpush.msra.mxu0 0.0
        %929 = vmatpush.msra.mxu0 %v914
        %930 = vmatpush.msra.mxu0 %v912
        %931 = vmatpush.msra.mxu0 %v910
        %932 = vmatpush.msra.mxu0 %v908
        %933 = vmatpush.msra.mxu0 %v906
        %934 = vmatpush.msra.mxu0 %v904
        %935 = vmatpush.msra.mxu0 %v902
        %936 = vmatpush.msra.mxu0 %v900
        %937 = vmatmul.f32.gmra.mxu0 %v919
        %v938 = vpop.f32.mrf.mxu0
        %v939 = vadd.f32 0.0, %v938
        %940 = vdwg.mxu0
        %941 = vmatpush.msra.mxu0 0.0
        %942 = vmatpush.msra.mxu0 0.0
        %943 = vmatpush.msra.mxu0 0.0
        %944 = vmatpush.msra.mxu0 0.0
        %945 = vmatpush.msra.mxu0 0.0
        %946 = vmatpush.msra.mxu0 0.0
        %947 = vmatpush.msra.mxu0 0.0
        %948 = vmatpush.msra.mxu0 0.0
        %949 = vmatpush.msra.mxu0 %v915
        %950 = vmatpush.msra.mxu0 %v913
        %951 = vmatpush.msra.mxu0 %v911
        %952 = vmatpush.msra.mxu0 %v909
        %953 = vmatpush.msra.mxu0 %v907
        %954 = vmatpush.msra.mxu0 %v905
        %955 = vmatpush.msra.mxu0 %v903
        %956 = vmatpush.msra.mxu0 %v901
        %957 = vmatmul.f32.gmra.mxu0 %v919
        %v958 = vpop.f32.mrf.mxu0
        %v959 = vadd.f32 0.0, %v958
        %960 = vdwg.mxu0
        %961 = vst [vmem:[%s560] sm:$0xff] %v939
        %962 = vst.msk [vmem:[%s560 + $0x8] sm:$0xff] %vm917, %v959
        %v963 = vld [vmem:[#allocation2] sm:$0x1]
        %v964 = vld [vmem:[#allocation14] sm:$0xff]
        %v965 = vld [vmem:[#allocation14 + $0x8] sm:$0xff]
        %v966 = vld [vmem:[#allocation14 + $0x10] sm:$0xff]
        %v967 = vld [vmem:[#allocation14 + $0x18] sm:$0xff]
        %v968 = vld [vmem:[#allocation14 + $0x20] sm:$0xff]
        %v969 = vld [vmem:[#allocation14 + $0x28] sm:$0xff]
        %v970 = vld [vmem:[#allocation14 + $0x30] sm:$0xff]
        %v971 = vld [vmem:[#allocation14 + $0x38] sm:$0xff]
        %v972 = vld [vmem:[#allocation14 + $0x40] sm:$0xff]
        %v973 = vld [vmem:[#allocation14 + $0x48] sm:$0xff]
        %v974 = vld [vmem:[#allocation14 + $0x50] sm:$0xff]
        %v975 = vld [vmem:[#allocation14 + $0x58] sm:$0xff]
        %v976 = vld [vmem:[#allocation14 + $0x60] sm:$0xff]
        %v977 = vld [vmem:[#allocation14 + $0x68] sm:$0xff]
        %v978 = vld [vmem:[#allocation14 + $0x70] sm:$0xff]
        %v979 = vld [vmem:[#allocation14 + $0x78] sm:$0xff]
        %v981 = vperm.slane %v963, 0
        %982 = vset.pattern.permute.xlu0 0
        %983 = vperm.xlu0 %982, %v981
        %v984 = vpop.permute.xlu0 %983
        %v986 = vmul.f32 %v984, %v964
        %v987 = vmul.f32 %v984, %v965
        %v988 = vmul.f32 %v984, %v966
        %v989 = vmul.f32 %v984, %v967
        %v990 = vmul.f32 %v984, %v968
        %v991 = vmul.f32 %v984, %v969
        %v992 = vmul.f32 %v984, %v970
        %v993 = vmul.f32 %v984, %v971
        %v994 = vmul.f32 %v984, %v972
        %v995 = vmul.f32 %v984, %v973
        %v996 = vmul.f32 %v984, %v974
        %v997 = vmul.f32 %v984, %v975
        %v998 = vmul.f32 %v984, %v976
        %v999 = vmul.f32 %v984, %v977
        %v1000 = vmul.f32 %v984, %v978
        %v1001 = vmul.f32 %v984, %v979
        %s1002 = scalar_lea.vmem [#allocation14], 128
        %v1003 = vld [vmem:[%s1002] sm:$0xff]
        %v1004 = vld [vmem:[%s1002 + $0x8] sm:$0xff]
        %v1005 = vld [vmem:[%s1002 + $0x10] sm:$0xff]
        %v1006 = vld [vmem:[%s1002 + $0x18] sm:$0xff]
        %v1007 = vld [vmem:[%s1002 + $0x20] sm:$0xff]
        %v1008 = vld [vmem:[%s1002 + $0x28] sm:$0xff]
        %v1009 = vld [vmem:[%s1002 + $0x30] sm:$0xff]
        %v1010 = vld [vmem:[%s1002 + $0x38] sm:$0xff]
        %v1011 = vld [vmem:[%s1002 + $0x40] sm:$0xff]
        %v1012 = vld [vmem:[%s1002 + $0x48] sm:$0xff]
        %v1013 = vld [vmem:[%s1002 + $0x50] sm:$0xff]
        %v1014 = vld [vmem:[%s1002 + $0x58] sm:$0xff]
        %v1015 = vld [vmem:[%s1002 + $0x60] sm:$0xff]
        %v1016 = vld [vmem:[%s1002 + $0x68] sm:$0xff]
        %v1017 = vld [vmem:[%s1002 + $0x70] sm:$0xff]
        %v1018 = vld [vmem:[%s1002 + $0x78] sm:$0xff]
        %1019 = vset.pattern.permute.xlu0 1
        %1020 = vperm.xlu0 %1019, %v981
        %v1021 = vpop.permute.xlu0 %1020
        %v1023 = vmul.f32 %v1021, %v1003
        %v1024 = vmul.f32 %v1021, %v1004
        %v1025 = vmul.f32 %v1021, %v1005
        %v1026 = vmul.f32 %v1021, %v1006
        %v1027 = vmul.f32 %v1021, %v1007
        %v1028 = vmul.f32 %v1021, %v1008
        %v1029 = vmul.f32 %v1021, %v1009
        %v1030 = vmul.f32 %v1021, %v1010
        %v1031 = vmul.f32 %v1021, %v1011
        %v1032 = vmul.f32 %v1021, %v1012
        %v1033 = vmul.f32 %v1021, %v1013
        %v1034 = vmul.f32 %v1021, %v1014
        %v1035 = vmul.f32 %v1021, %v1015
        %v1036 = vmul.f32 %v1021, %v1016
        %v1037 = vmul.f32 %v1021, %v1017
        %v1038 = vmul.f32 %v1021, %v1018
        %v1039 = vadd.f32 %v986, %v1023
        %v1040 = vadd.f32 %v987, %v1024
        %v1041 = vadd.f32 %v988, %v1025
        %v1042 = vadd.f32 %v989, %v1026
        %v1043 = vadd.f32 %v990, %v1027
        %v1044 = vadd.f32 %v991, %v1028
        %v1045 = vadd.f32 %v992, %v1029
        %v1046 = vadd.f32 %v993, %v1030
        %v1047 = vadd.f32 %v994, %v1031
        %v1048 = vadd.f32 %v995, %v1032
        %v1049 = vadd.f32 %v996, %v1033
        %v1050 = vadd.f32 %v997, %v1034
        %v1051 = vadd.f32 %v998, %v1035
        %v1052 = vadd.f32 %v999, %v1036
        %v1053 = vadd.f32 %v1000, %v1037
        %v1054 = vadd.f32 %v1001, %v1038
        %s1055 = scalar_lea.vmem [#allocation14], 256
        %v1056 = vld [vmem:[%s1055] sm:$0xff]
        %v1057 = vld [vmem:[%s1055 + $0x8] sm:$0xff]
        %v1058 = vld [vmem:[%s1055 + $0x10] sm:$0xff]
        %v1059 = vld [vmem:[%s1055 + $0x18] sm:$0xff]
        %v1060 = vld [vmem:[%s1055 + $0x20] sm:$0xff]
        %v1061 = vld [vmem:[%s1055 + $0x28] sm:$0xff]
        %v1062 = vld [vmem:[%s1055 + $0x30] sm:$0xff]
        %v1063 = vld [vmem:[%s1055 + $0x38] sm:$0xff]
        %v1064 = vld [vmem:[%s1055 + $0x40] sm:$0xff]
        %v1065 = vld [vmem:[%s1055 + $0x48] sm:$0xff]
        %v1066 = vld [vmem:[%s1055 + $0x50] sm:$0xff]
        %v1067 = vld [vmem:[%s1055 + $0x58] sm:$0xff]
        %v1068 = vld [vmem:[%s1055 + $0x60] sm:$0xff]
        %v1069 = vld [vmem:[%s1055 + $0x68] sm:$0xff]
        %v1070 = vld [vmem:[%s1055 + $0x70] sm:$0xff]
        %v1071 = vld [vmem:[%s1055 + $0x78] sm:$0xff]
        %1072 = vset.pattern.permute.xlu0 2
        %1073 = vperm.xlu0 %1072, %v981
        %v1074 = vpop.permute.xlu0 %1073
        %v1076 = vmul.f32 %v1074, %v1056
        %v1077 = vmul.f32 %v1074, %v1057
        %v1078 = vmul.f32 %v1074, %v1058
        %v1079 = vmul.f32 %v1074, %v1059
        %v1080 = vmul.f32 %v1074, %v1060
        %v1081 = vmul.f32 %v1074, %v1061
        %v1082 = vmul.f32 %v1074, %v1062
        %v1083 = vmul.f32 %v1074, %v1063
        %v1084 = vmul.f32 %v1074, %v1064
        %v1085 = vmul.f32 %v1074, %v1065
        %v1086 = vmul.f32 %v1074, %v1066
        %v1087 = vmul.f32 %v1074, %v1067
        %v1088 = vmul.f32 %v1074, %v1068
        %v1089 = vmul.f32 %v1074, %v1069
        %v1090 = vmul.f32 %v1074, %v1070
        %v1091 = vmul.f32 %v1074, %v1071
        %v1092 = vadd.f32 %v1039, %v1076
        %v1093 = vadd.f32 %v1040, %v1077
        %v1094 = vadd.f32 %v1041, %v1078
        %v1095 = vadd.f32 %v1042, %v1079
        %v1096 = vadd.f32 %v1043, %v1080
        %v1097 = vadd.f32 %v1044, %v1081
        %v1098 = vadd.f32 %v1045, %v1082
        %v1099 = vadd.f32 %v1046, %v1083
        %v1100 = vadd.f32 %v1047, %v1084
        %v1101 = vadd.f32 %v1048, %v1085
        %v1102 = vadd.f32 %v1049, %v1086
        %v1103 = vadd.f32 %v1050, %v1087
        %v1104 = vadd.f32 %v1051, %v1088
        %v1105 = vadd.f32 %v1052, %v1089
        %v1106 = vadd.f32 %v1053, %v1090
        %v1107 = vadd.f32 %v1054, %v1091
        %s1108 = scalar_lea.vmem [#allocation14], 384
        %v1109 = vld [vmem:[%s1108] sm:$0xff]
        %v1110 = vld [vmem:[%s1108 + $0x8] sm:$0xff]
        %v1111 = vld [vmem:[%s1108 + $0x10] sm:$0xff]
        %v1112 = vld [vmem:[%s1108 + $0x18] sm:$0xff]
        %v1113 = vld [vmem:[%s1108 + $0x20] sm:$0xff]
        %v1114 = vld [vmem:[%s1108 + $0x28] sm:$0xff]
        %v1115 = vld [vmem:[%s1108 + $0x30] sm:$0xff]
        %v1116 = vld [vmem:[%s1108 + $0x38] sm:$0xff]
        %v1117 = vld [vmem:[%s1108 + $0x40] sm:$0xff]
        %v1118 = vld [vmem:[%s1108 + $0x48] sm:$0xff]
        %v1119 = vld [vmem:[%s1108 + $0x50] sm:$0xff]
        %v1120 = vld [vmem:[%s1108 + $0x58] sm:$0xff]
        %v1121 = vld [vmem:[%s1108 + $0x60] sm:$0xff]
        %v1122 = vld [vmem:[%s1108 + $0x68] sm:$0xff]
        %v1123 = vld [vmem:[%s1108 + $0x70] sm:$0xff]
        %v1124 = vld [vmem:[%s1108 + $0x78] sm:$0xff]
        %1125 = vset.pattern.permute.xlu0 3
        %1126 = vperm.xlu0 %1125, %v981
        %v1127 = vpop.permute.xlu0 %1126
        %v1129 = vmul.f32 %v1127, %v1109
        %v1130 = vmul.f32 %v1127, %v1110
        %v1131 = vmul.f32 %v1127, %v1111
        %v1132 = vmul.f32 %v1127, %v1112
        %v1133 = vmul.f32 %v1127, %v1113
        %v1134 = vmul.f32 %v1127, %v1114
        %v1135 = vmul.f32 %v1127, %v1115
        %v1136 = vmul.f32 %v1127, %v1116
        %v1137 = vmul.f32 %v1127, %v1117
        %v1138 = vmul.f32 %v1127, %v1118
        %v1139 = vmul.f32 %v1127, %v1119
        %v1140 = vmul.f32 %v1127, %v1120
        %v1141 = vmul.f32 %v1127, %v1121
        %v1142 = vmul.f32 %v1127, %v1122
        %v1143 = vmul.f32 %v1127, %v1123
        %v1144 = vmul.f32 %v1127, %v1124
        %v1145 = vadd.f32 %v1092, %v1129
        %v1146 = vadd.f32 %v1093, %v1130
        %v1147 = vadd.f32 %v1094, %v1131
        %v1148 = vadd.f32 %v1095, %v1132
        %v1149 = vadd.f32 %v1096, %v1133
        %v1150 = vadd.f32 %v1097, %v1134
        %v1151 = vadd.f32 %v1098, %v1135
        %v1152 = vadd.f32 %v1099, %v1136
        %v1153 = vadd.f32 %v1100, %v1137
        %v1154 = vadd.f32 %v1101, %v1138
        %v1155 = vadd.f32 %v1102, %v1139
        %v1156 = vadd.f32 %v1103, %v1140
        %v1157 = vadd.f32 %v1104, %v1141
        %v1158 = vadd.f32 %v1105, %v1142
        %v1159 = vadd.f32 %v1106, %v1143
        %v1160 = vadd.f32 %v1107, %v1144
        %v1161 = vld [vmem:[%s482] sm:$0xff]
        %v1163 = vsel %vm917, %v1161, 0
        %1165 = vmatpush.msra.mxu0 0.0
        %1166 = vmatpush.msra.mxu0 0.0
        %1167 = vmatpush.msra.mxu0 0.0
        %1168 = vmatpush.msra.mxu0 0.0
        %1169 = vmatpush.msra.mxu0 0.0
        %1170 = vmatpush.msra.mxu0 0.0
        %1171 = vmatpush.msra.mxu0 0.0
        %1172 = vmatpush.msra.mxu0 0.0
        %1173 = vmatpush.msra.mxu0 %v1159
        %1174 = vmatpush.msra.mxu0 %v1157
        %1175 = vmatpush.msra.mxu0 %v1155
        %1176 = vmatpush.msra.mxu0 %v1153
        %1177 = vmatpush.msra.mxu0 %v1151
        %1178 = vmatpush.msra.mxu0 %v1149
        %1179 = vmatpush.msra.mxu0 %v1147
        %1180 = vmatpush.msra.mxu0 %v1145
        %1181 = vmatmul.f32.gmra.mxu0 %v1163
        %v1182 = vpop.f32.mrf.mxu0
        %v1183 = vadd.f32 0.0, %v1182
        %1184 = vdwg.mxu0
        %1185 = vmatpush.msra.mxu0 0.0
        %1186 = vmatpush.msra.mxu0 0.0
        %1187 = vmatpush.msra.mxu0 0.0
        %1188 = vmatpush.msra.mxu0 0.0
        %1189 = vmatpush.msra.mxu0 0.0
        %1190 = vmatpush.msra.mxu0 0.0
        %1191 = vmatpush.msra.mxu0 0.0
        %1192 = vmatpush.msra.mxu0 0.0
        %1193 = vmatpush.msra.mxu0 %v1160
        %1194 = vmatpush.msra.mxu0 %v1158
        %1195 = vmatpush.msra.mxu0 %v1156
        %1196 = vmatpush.msra.mxu0 %v1154
        %1197 = vmatpush.msra.mxu0 %v1152
        %1198 = vmatpush.msra.mxu0 %v1150
        %1199 = vmatpush.msra.mxu0 %v1148
        %1200 = vmatpush.msra.mxu0 %v1146
        %1201 = vmatmul.f32.gmra.mxu0 %v1163
        %v1202 = vpop.f32.mrf.mxu0
        %v1203 = vadd.f32 0.0, %v1202
        %1204 = vdwg.mxu0
        %1205 = vst [vmem:[%s567] sm:$0xff] %v1183
        %1206 = vst.msk [vmem:[%s567 + $0x8] sm:$0xff] %vm917, %v1203
        %v1207 = vld [vmem:[#allocation2] sm:$0x1]
        %v1208 = vld [vmem:[#allocation15] sm:$0xff]
        %v1209 = vld [vmem:[#allocation15 + $0x8] sm:$0xff]
        %v1210 = vld [vmem:[#allocation15 + $0x10] sm:$0xff]
        %v1211 = vld [vmem:[#allocation15 + $0x18] sm:$0xff]
        %v1212 = vld [vmem:[#allocation15 + $0x20] sm:$0xff]
        %v1213 = vld [vmem:[#allocation15 + $0x28] sm:$0xff]
        %v1214 = vld [vmem:[#allocation15 + $0x30] sm:$0xff]
        %v1215 = vld [vmem:[#allocation15 + $0x38] sm:$0xff]
        %v1216 = vld [vmem:[#allocation15 + $0x40] sm:$0xff]
        %v1217 = vld [vmem:[#allocation15 + $0x48] sm:$0xff]
        %v1218 = vld [vmem:[#allocation15 + $0x50] sm:$0xff]
        %v1219 = vld [vmem:[#allocation15 + $0x58] sm:$0xff]
        %v1220 = vld [vmem:[#allocation15 + $0x60] sm:$0xff]
        %v1221 = vld [vmem:[#allocation15 + $0x68] sm:$0xff]
        %v1222 = vld [vmem:[#allocation15 + $0x70] sm:$0xff]
        %v1223 = vld [vmem:[#allocation15 + $0x78] sm:$0xff]
        %v1225 = vperm.slane %v1207, 0
        %1226 = vset.pattern.permute.xlu0 0
        %1227 = vperm.xlu0 %1226, %v1225
        %v1228 = vpop.permute.xlu0 %1227
        %v1230 = vmul.f32 %v1228, %v1208
        %v1231 = vmul.f32 %v1228, %v1209
        %v1232 = vmul.f32 %v1228, %v1210
        %v1233 = vmul.f32 %v1228, %v1211
        %v1234 = vmul.f32 %v1228, %v1212
        %v1235 = vmul.f32 %v1228, %v1213
        %v1236 = vmul.f32 %v1228, %v1214
        %v1237 = vmul.f32 %v1228, %v1215
        %v1238 = vmul.f32 %v1228, %v1216
        %v1239 = vmul.f32 %v1228, %v1217
        %v1240 = vmul.f32 %v1228, %v1218
        %v1241 = vmul.f32 %v1228, %v1219
        %v1242 = vmul.f32 %v1228, %v1220
        %v1243 = vmul.f32 %v1228, %v1221
        %v1244 = vmul.f32 %v1228, %v1222
        %v1245 = vmul.f32 %v1228, %v1223
        %s1246 = scalar_lea.vmem [#allocation15], 128
        %v1247 = vld [vmem:[%s1246] sm:$0xff]
        %v1248 = vld [vmem:[%s1246 + $0x8] sm:$0xff]
        %v1249 = vld [vmem:[%s1246 + $0x10] sm:$0xff]
        %v1250 = vld [vmem:[%s1246 + $0x18] sm:$0xff]
        %v1251 = vld [vmem:[%s1246 + $0x20] sm:$0xff]
        %v1252 = vld [vmem:[%s1246 + $0x28] sm:$0xff]
        %v1253 = vld [vmem:[%s1246 + $0x30] sm:$0xff]
        %v1254 = vld [vmem:[%s1246 + $0x38] sm:$0xff]
        %v1255 = vld [vmem:[%s1246 + $0x40] sm:$0xff]
        %v1256 = vld [vmem:[%s1246 + $0x48] sm:$0xff]
        %v1257 = vld [vmem:[%s1246 + $0x50] sm:$0xff]
        %v1258 = vld [vmem:[%s1246 + $0x58] sm:$0xff]
        %v1259 = vld [vmem:[%s1246 + $0x60] sm:$0xff]
        %v1260 = vld [vmem:[%s1246 + $0x68] sm:$0xff]
        %v1261 = vld [vmem:[%s1246 + $0x70] sm:$0xff]
        %v1262 = vld [vmem:[%s1246 + $0x78] sm:$0xff]
        %1263 = vset.pattern.permute.xlu0 1
        %1264 = vperm.xlu0 %1263, %v1225
        %v1265 = vpop.permute.xlu0 %1264
        %v1267 = vmul.f32 %v1265, %v1247
        %v1268 = vmul.f32 %v1265, %v1248
        %v1269 = vmul.f32 %v1265, %v1249
        %v1270 = vmul.f32 %v1265, %v1250
        %v1271 = vmul.f32 %v1265, %v1251
        %v1272 = vmul.f32 %v1265, %v1252
        %v1273 = vmul.f32 %v1265, %v1253
        %v1274 = vmul.f32 %v1265, %v1254
        %v1275 = vmul.f32 %v1265, %v1255
        %v1276 = vmul.f32 %v1265, %v1256
        %v1277 = vmul.f32 %v1265, %v1257
        %v1278 = vmul.f32 %v1265, %v1258
        %v1279 = vmul.f32 %v1265, %v1259
        %v1280 = vmul.f32 %v1265, %v1260
        %v1281 = vmul.f32 %v1265, %v1261
        %v1282 = vmul.f32 %v1265, %v1262
        %v1283 = vadd.f32 %v1230, %v1267
        %v1284 = vadd.f32 %v1231, %v1268
        %v1285 = vadd.f32 %v1232, %v1269
        %v1286 = vadd.f32 %v1233, %v1270
        %v1287 = vadd.f32 %v1234, %v1271
        %v1288 = vadd.f32 %v1235, %v1272
        %v1289 = vadd.f32 %v1236, %v1273
        %v1290 = vadd.f32 %v1237, %v1274
        %v1291 = vadd.f32 %v1238, %v1275
        %v1292 = vadd.f32 %v1239, %v1276
        %v1293 = vadd.f32 %v1240, %v1277
        %v1294 = vadd.f32 %v1241, %v1278
        %v1295 = vadd.f32 %v1242, %v1279
        %v1296 = vadd.f32 %v1243, %v1280
        %v1297 = vadd.f32 %v1244, %v1281
        %v1298 = vadd.f32 %v1245, %v1282
        %s1299 = scalar_lea.vmem [#allocation15], 256
        %v1300 = vld [vmem:[%s1299] sm:$0xff]
        %v1301 = vld [vmem:[%s1299 + $0x8] sm:$0xff]
        %v1302 = vld [vmem:[%s1299 + $0x10] sm:$0xff]
        %v1303 = vld [vmem:[%s1299 + $0x18] sm:$0xff]
        %v1304 = vld [vmem:[%s1299 + $0x20] sm:$0xff]
        %v1305 = vld [vmem:[%s1299 + $0x28] sm:$0xff]
        %v1306 = vld [vmem:[%s1299 + $0x30] sm:$0xff]
        %v1307 = vld [vmem:[%s1299 + $0x38] sm:$0xff]
        %v1308 = vld [vmem:[%s1299 + $0x40] sm:$0xff]
        %v1309 = vld [vmem:[%s1299 + $0x48] sm:$0xff]
        %v1310 = vld [vmem:[%s1299 + $0x50] sm:$0xff]
        %v1311 = vld [vmem:[%s1299 + $0x58] sm:$0xff]
        %v1312 = vld [vmem:[%s1299 + $0x60] sm:$0xff]
        %v1313 = vld [vmem:[%s1299 + $0x68] sm:$0xff]
        %v1314 = vld [vmem:[%s1299 + $0x70] sm:$0xff]
        %v1315 = vld [vmem:[%s1299 + $0x78] sm:$0xff]
        %1316 = vset.pattern.permute.xlu0 2
        %1317 = vperm.xlu0 %1316, %v1225
        %v1318 = vpop.permute.xlu0 %1317
        %v1320 = vmul.f32 %v1318, %v1300
        %v1321 = vmul.f32 %v1318, %v1301
        %v1322 = vmul.f32 %v1318, %v1302
        %v1323 = vmul.f32 %v1318, %v1303
        %v1324 = vmul.f32 %v1318, %v1304
        %v1325 = vmul.f32 %v1318, %v1305
        %v1326 = vmul.f32 %v1318, %v1306
        %v1327 = vmul.f32 %v1318, %v1307
        %v1328 = vmul.f32 %v1318, %v1308
        %v1329 = vmul.f32 %v1318, %v1309
        %v1330 = vmul.f32 %v1318, %v1310
        %v1331 = vmul.f32 %v1318, %v1311
        %v1332 = vmul.f32 %v1318, %v1312
        %v1333 = vmul.f32 %v1318, %v1313
        %v1334 = vmul.f32 %v1318, %v1314
        %v1335 = vmul.f32 %v1318, %v1315
        %v1336 = vadd.f32 %v1283, %v1320
        %v1337 = vadd.f32 %v1284, %v1321
        %v1338 = vadd.f32 %v1285, %v1322
        %v1339 = vadd.f32 %v1286, %v1323
        %v1340 = vadd.f32 %v1287, %v1324
        %v1341 = vadd.f32 %v1288, %v1325
        %v1342 = vadd.f32 %v1289, %v1326
        %v1343 = vadd.f32 %v1290, %v1327
        %v1344 = vadd.f32 %v1291, %v1328
        %v1345 = vadd.f32 %v1292, %v1329
        %v1346 = vadd.f32 %v1293, %v1330
        %v1347 = vadd.f32 %v1294, %v1331
        %v1348 = vadd.f32 %v1295, %v1332
        %v1349 = vadd.f32 %v1296, %v1333
        %v1350 = vadd.f32 %v1297, %v1334
        %v1351 = vadd.f32 %v1298, %v1335
        %s1352 = scalar_lea.vmem [#allocation15], 384
        %v1353 = vld [vmem:[%s1352] sm:$0xff]
        %v1354 = vld [vmem:[%s1352 + $0x8] sm:$0xff]
        %v1355 = vld [vmem:[%s1352 + $0x10] sm:$0xff]
        %v1356 = vld [vmem:[%s1352 + $0x18] sm:$0xff]
        %v1357 = vld [vmem:[%s1352 + $0x20] sm:$0xff]
        %v1358 = vld [vmem:[%s1352 + $0x28] sm:$0xff]
        %v1359 = vld [vmem:[%s1352 + $0x30] sm:$0xff]
        %v1360 = vld [vmem:[%s1352 + $0x38] sm:$0xff]
        %v1361 = vld [vmem:[%s1352 + $0x40] sm:$0xff]
        %v1362 = vld [vmem:[%s1352 + $0x48] sm:$0xff]
        %v1363 = vld [vmem:[%s1352 + $0x50] sm:$0xff]
        %v1364 = vld [vmem:[%s1352 + $0x58] sm:$0xff]
        %v1365 = vld [vmem:[%s1352 + $0x60] sm:$0xff]
        %v1366 = vld [vmem:[%s1352 + $0x68] sm:$0xff]
        %v1367 = vld [vmem:[%s1352 + $0x70] sm:$0xff]
        %v1368 = vld [vmem:[%s1352 + $0x78] sm:$0xff]
        %1369 = vset.pattern.permute.xlu0 3
        %1370 = vperm.xlu0 %1369, %v1225
        %v1371 = vpop.permute.xlu0 %1370
        %v1373 = vmul.f32 %v1371, %v1353
        %v1374 = vmul.f32 %v1371, %v1354
        %v1375 = vmul.f32 %v1371, %v1355
        %v1376 = vmul.f32 %v1371, %v1356
        %v1377 = vmul.f32 %v1371, %v1357
        %v1378 = vmul.f32 %v1371, %v1358
        %v1379 = vmul.f32 %v1371, %v1359
        %v1380 = vmul.f32 %v1371, %v1360
        %v1381 = vmul.f32 %v1371, %v1361
        %v1382 = vmul.f32 %v1371, %v1362
        %v1383 = vmul.f32 %v1371, %v1363
        %v1384 = vmul.f32 %v1371, %v1364
        %v1385 = vmul.f32 %v1371, %v1365
        %v1386 = vmul.f32 %v1371, %v1366
        %v1387 = vmul.f32 %v1371, %v1367
        %v1388 = vmul.f32 %v1371, %v1368
        %v1389 = vadd.f32 %v1336, %v1373
        %v1390 = vadd.f32 %v1337, %v1374
        %v1391 = vadd.f32 %v1338, %v1375
        %v1392 = vadd.f32 %v1339, %v1376
        %v1393 = vadd.f32 %v1340, %v1377
        %v1394 = vadd.f32 %v1341, %v1378
        %v1395 = vadd.f32 %v1342, %v1379
        %v1396 = vadd.f32 %v1343, %v1380
        %v1397 = vadd.f32 %v1344, %v1381
        %v1398 = vadd.f32 %v1345, %v1382
        %v1399 = vadd.f32 %v1346, %v1383
        %v1400 = vadd.f32 %v1347, %v1384
        %v1401 = vadd.f32 %v1348, %v1385
        %v1402 = vadd.f32 %v1349, %v1386
        %v1403 = vadd.f32 %v1350, %v1387
        %v1404 = vadd.f32 %v1351, %v1388
        %v1405 = vld [vmem:[%s492] sm:$0xff]
        %v1407 = vsel %vm917, %v1405, 0
        %1409 = vmatpush.msra.mxu0 0.0
        %1410 = vmatpush.msra.mxu0 0.0
        %1411 = vmatpush.msra.mxu0 0.0
        %1412 = vmatpush.msra.mxu0 0.0
        %1413 = vmatpush.msra.mxu0 0.0
        %1414 = vmatpush.msra.mxu0 0.0
        %1415 = vmatpush.msra.mxu0 0.0
        %1416 = vmatpush.msra.mxu0 0.0
        %1417 = vmatpush.msra.mxu0 %v1403
        %1418 = vmatpush.msra.mxu0 %v1401
        %1419 = vmatpush.msra.mxu0 %v1399
        %1420 = vmatpush.msra.mxu0 %v1397
        %1421 = vmatpush.msra.mxu0 %v1395
        %1422 = vmatpush.msra.mxu0 %v1393
        %1423 = vmatpush.msra.mxu0 %v1391
        %1424 = vmatpush.msra.mxu0 %v1389
        %1425 = vmatmul.f32.gmra.mxu0 %v1407
        %v1426 = vpop.f32.mrf.mxu0
        %v1427 = vadd.f32 0.0, %v1426
        %1428 = vdwg.mxu0
        %1429 = vmatpush.msra.mxu0 0.0
        %1430 = vmatpush.msra.mxu0 0.0
        %1431 = vmatpush.msra.mxu0 0.0
        %1432 = vmatpush.msra.mxu0 0.0
        %1433 = vmatpush.msra.mxu0 0.0
        %1434 = vmatpush.msra.mxu0 0.0
        %1435 = vmatpush.msra.mxu0 0.0
        %1436 = vmatpush.msra.mxu0 0.0
        %1437 = vmatpush.msra.mxu0 %v1404
        %1438 = vmatpush.msra.mxu0 %v1402
        %1439 = vmatpush.msra.mxu0 %v1400
        %1440 = vmatpush.msra.mxu0 %v1398
        %1441 = vmatpush.msra.mxu0 %v1396
        %1442 = vmatpush.msra.mxu0 %v1394
        %1443 = vmatpush.msra.mxu0 %v1392
        %1444 = vmatpush.msra.mxu0 %v1390
        %1445 = vmatmul.f32.gmra.mxu0 %v1407
        %v1446 = vpop.f32.mrf.mxu0
        %v1447 = vadd.f32 0.0, %v1446
        %1448 = vdwg.mxu0
        %1449 = vst [vmem:[%s574] sm:$0xff] %v1427
        %1450 = vst.msk [vmem:[%s574 + $0x8] sm:$0xff] %vm917, %v1447
        %s1451 = sand.u32 %s235, 1
        %s1452 = scalar_lea.sflag [#allocation5], %s1451
        %s1453 = sand.u32 %s235, 1
        %s1454 = smul.addr %s1453, 16
        %s1455 = scalar_lea.vmem [#allocation17], %s1454
        %s1456 = sand.u32 %s39, 1
        %s1457 = scalar_lea.sflag [#allocation19], %s1456
        %s1458 = sand.u32 %s261, 1
        %s1459 = smul.addr %s1458, 16
        %s1460 = scalar_lea.vmem [#allocation18], %s1459
        %s1461 = sand.u32 %s39, 1
        %s1462 = scalar_lea.sflag [#allocation19], %s1461
        %s1463 = sand.u32 %s287, 1
        %s1464 = smul.addr %s1463, 16
        %s1465 = scalar_lea.vmem [#allocation20], %s1464
        // Predicated region
        $region85: #{tpu_custom_call.1} parent=51 // pred_check
          %p1466 = pneg %p245
        $region86: #{tpu_custom_call.1} parent=51 // pred_check_branch
          %1468 = sbr.rel (%p1466) target = $region88
        $region87: #{tpu_custom_call.1} parent=51 // pred_region
          %1470 = vsyncadd %s1452, 0
          %s1471 = smul.addr %s39, 2
          %s1472 = smul.addr %s1471, 8
          %s1473 = scalar_lea.hbm %s8, %s1472
          %s1475 = sshll.u32 %s1455, 4
          %s1476 = int_to_ptr.vmem [resolvable:$true] %s1475
          %s1477 = sshll.u32 %s1473, 4
          %s1478 = int_to_ptr.hbm [resolvable:$true] %s1477
          %1480 = dma.vmem_to_hbm [thread:$0]  %s1476, 256, %s1478, %s1452
        $region88: #{tpu_custom_call.1} parent=51 // pred_fallthru
          _
        // Predicated region
        $region89: #{tpu_custom_call.1} parent=51 // pred_check
          %p1481 = pneg %p271
        $region90: #{tpu_custom_call.1} parent=51 // pred_check_branch
          %1483 = sbr.rel (%p1481) target = $region92
        $region91: #{tpu_custom_call.1} parent=51 // pred_region
          %1485 = vsyncadd %s1457, 0
          %s1486 = smul.addr %s39, 2
          %s1487 = smul.addr %s1486, 8
          %s1488 = scalar_lea.hbm %s9, %s1487
          %s1490 = sshll.u32 %s1460, 4
          %s1491 = int_to_ptr.vmem [resolvable:$true] %s1490
          %s1492 = sshll.u32 %s1488, 4
          %s1493 = int_to_ptr.hbm [resolvable:$true] %s1492
          %1495 = dma.vmem_to_hbm [thread:$0]  %s1491, 256, %s1493, %s1457
        $region92: #{tpu_custom_call.1} parent=51 // pred_fallthru
          _
        // Predicated region
        $region93: #{tpu_custom_call.1} parent=51 // pred_check
          %p1496 = pneg %p297
        $region94: #{tpu_custom_call.1} parent=51 // pred_check_branch
          %1498 = sbr.rel (%p1496) target = $region96
        $region95: #{tpu_custom_call.1} parent=51 // pred_region
          %1500 = vsyncadd %s1462, 0
          %s1501 = smul.addr %s39, 2
          %s1502 = smul.addr %s1501, 8
          %s1503 = scalar_lea.hbm %s10, %s1502
          %s1505 = sshll.u32 %s1465, 4
          %s1506 = int_to_ptr.vmem [resolvable:$true] %s1505
          %s1507 = sshll.u32 %s1503, 4
          %s1508 = int_to_ptr.hbm [resolvable:$true] %s1507
          %1510 = dma.vmem_to_hbm [thread:$0]  %s1506, 256, %s1508, %s1462
        $region96: #{tpu_custom_call.1} parent=51 // pred_fallthru
          _
      $region52: #{tpu_custom_call.1} parent=5 // pred_fallthru
        _
      %p1511 = scmp.le.s32.totalorder 2, %s34
      // Predicated region
      $region97: #{tpu_custom_call.1} parent=5 // pred_check
        %p1512 = pneg %p1511
      $region98: #{tpu_custom_call.1} parent=5 // pred_check_branch
        %1514 = sbr.rel (%p1512) target = $region100
      $region99: #{tpu_custom_call.1} parent=5 // pred_region
        %s1515 = ssub.s32 %s34, 2
        // Predicated region
        $region101: #{tpu_custom_call.1} parent=99 // pred_check
          %p1516 = pneg %p251
        $region102: #{tpu_custom_call.1} parent=99 // pred_check_branch
          %1518 = sbr.rel (%p1516) target = $region104
        $region103: #{tpu_custom_call.1} parent=99 // pred_region
          %s1519 = sand.u32 %s236, 1
          %s1520 = scalar_lea.sflag [#allocation5], %s1519
          %s1521 = sand.u32 %s236, 1
          %s1522 = smul.addr %s1521, 16
          %s1523 = scalar_lea.vmem [#allocation17], %s1522
          %1525 = dma.done %s1520, 256
        $region104: #{tpu_custom_call.1} parent=99 // pred_fallthru
          _
        // Predicated region
        $region105: #{tpu_custom_call.1} parent=99 // pred_check
          %p1526 = pneg %p277
        $region106: #{tpu_custom_call.1} parent=99 // pred_check_branch
          %1528 = sbr.rel (%p1526) target = $region108
        $region107: #{tpu_custom_call.1} parent=99 // pred_region
          %s1529 = sand.u32 %s40, 1
          %s1530 = scalar_lea.sflag [#allocation19], %s1529
          %s1531 = sand.u32 %s262, 1
          %s1532 = smul.addr %s1531, 16
          %s1533 = scalar_lea.vmem [#allocation18], %s1532
          %1535 = dma.done %s1530, 256
        $region108: #{tpu_custom_call.1} parent=99 // pred_fallthru
          _
        // Predicated region
        $region109: #{tpu_custom_call.1} parent=99 // pred_check
          %p1536 = pneg %p303
        $region110: #{tpu_custom_call.1} parent=99 // pred_check_branch
          %1538 = sbr.rel (%p1536) target = $region112
        $region111: #{tpu_custom_call.1} parent=99 // pred_region
          %s1539 = sand.u32 %s40, 1
          %s1540 = scalar_lea.sflag [#allocation19], %s1539
          %s1541 = sand.u32 %s288, 1
          %s1542 = smul.addr %s1541, 16
          %s1543 = scalar_lea.vmem [#allocation20], %s1542
          %1545 = dma.done %s1540, 256
        $region112: #{tpu_custom_call.1} parent=99 // pred_fallthru
          _
      $region100: #{tpu_custom_call.1} parent=5 // pred_fallthru
        _
    $region6: #{tpu_custom_call.1} parent=1 // loop_footer
      %s38 = sadd.s32 1, %s34
    $region7: #{tpu_custom_call.1} parent=1 // loop_footer_branch
      %33 = sbr.rel target = $region3
    $region8: #{tpu_custom_call.1} parent=1 // loop_exit
      _
    %1546 = vsyncpa [#allocation4], 1
    %s1547 = scalar_lea.sflag [#allocation4], 1
    %1548 = vsyncpa %s1547, 1
    %1549 = vsyncpa [#allocation7], 1
    %s1550 = scalar_lea.sflag [#allocation7], 1
    %1551 = vsyncpa %s1550, 1
    %1552 = vsyncpa [#allocation10], 1
    %s1553 = scalar_lea.sflag [#allocation10], 1
    %1554 = vsyncpa %s1553, 1
    %1555 = vsyncpa [#allocation13], 1
    %1556 = vsyncpa [#allocation16], 1
    %1557 = vsyncpa [#allocation5], 1
    %s1558 = scalar_lea.sflag [#allocation5], 1
    %1559 = vsyncpa %s1558, 1
    %1560 = vsyncpa [#allocation19], 1
    %s1561 = scalar_lea.sflag [#allocation19], 1
    %1562 = vsyncpa %s1561, 1

</llo_original>
